<compile_context>
chip_gen: v5e
topology: v5e:2x2
jax: 0.10.0
libtpu: 0.0.40
codegen_flags: <defaults>
</compile_context>

<pallas_src>
import functools

import jax
import jax.numpy as jnp
from jax.experimental import pallas as pl
from jax.experimental.pallas import tpu as pltpu


# ------------------------------ fused Pallas kernel ------------------------------ #

def _disc_fused_kernel(xcol_ref, w1_ref, b1_ref, w2c_ref, b2_ref, wl_ref, bl_ref,
                       sel_ref, ind_ref, o_ref, md1_ref, x2_ref, md2_ref,
                       *, Bt, Lp, Gq, Gp, K, C):
    """One grid step = Bt samples, everything resident in VMEM.

    xcol_ref : (1, Bt*Lp, K*Cin) bf16   im2col of the embeddings (per-sample row stride Lp)
    w1_ref   : (K*Cin, C) bf16          conv1 im2col weight        b1_ref : (1, C) f32
    w2c_ref  : (K*C, C) bf16            conv2 im2col weight        b2_ref : (1, C) f32
    wl_ref   : (C, 2*Gp) bf16           linear weight, wl[c, 2q+o] (zero for q >= P2)
    bl_ref   : (1, 128) f32             linear bias padded to 128 lanes
    sel_ref  : (2, Bt*Gp, 2*Gp) f32     per-row one-hot lane masks for logits 0 / 1
    ind_ref  : (Bt, Bt*Gp) f32          0/1 group-membership matrix (sample <- pooled row)
    o_ref    : (1, Bt, 128) f32         lane-dense logits block (lanes 0..1 are real)
    md1_ref  : (Bt*Lp - 2, C) f32       scratch: dense 3-max after conv1
    x2_ref   : (N2, K*C) bf16           scratch: lane-concat conv2 im2col operand
    md2_ref  : (Bt*Gq - 2, C) f32       scratch: dense 3-max after conv2 (+ zeroed tail)
    """
    BtL = Bt * Lp
    BtG = Bt * Gq
    BtP = Bt * Gp
    W1 = BtL - 2                    # rows of the dense 3-max after conv1
    N2 = BtG - (K - 1)              # conv2 output rows (boundary rows are finite garbage)
    W2 = N2 - 2                     # rows of the dense 3-max after conv2
    MD2 = md2_ref.shape[0]          # = BtG - 2 (covers every row the strided read touches)

    # ---- conv1: single im2col matmul (bf16 in, f32 acc), lane-dense N = C ----
    a1 = jnp.dot(xcol_ref[0], w1_ref[...], preferred_element_type=jnp.float32)   # (BtL, C)
    r1 = jnp.maximum(a1 + b1_ref[...], 0.0)                                       # bias + ReLU

    # ---- max_pool1d(3) #1: dense 3-max stored once; downsampling happens in the tap reads ----
    m1 = jnp.maximum(jnp.maximum(r1[0:W1, :], r1[1:W1 + 1, :]), r1[2:W1 + 2, :])  # (W1, C)
    md1_ref[...] = m1

    # ---- conv2 im2col: tap k = stride-3 read of md1 at offset 3k, lane block k of x2 ----
    for k in range(K):
        x2_ref[:, k * C:(k + 1) * C] = (
            md1_ref[pl.ds(3 * k, N2, stride=3), :].astype(jnp.bfloat16))

    # ---- conv2: ONE matmul, contraction K*C = 640 ----
    a2 = jnp.dot(x2_ref[...], w2c_ref[...], preferred_element_type=jnp.float32)   # (N2, C)
    r2 = jnp.maximum(a2 + b2_ref[...], 0.0)

    # ---- max_pool1d(3) #2: dense 3-max; zero the short tail the strided read also touches ----
    m2 = jnp.maximum(jnp.maximum(r2[0:W2, :], r2[1:W2 + 1, :]), r2[2:W2 + 2, :])   # (W2, C)
    md2_ref[pl.ds(0, W2), :] = m2
    md2_ref[pl.ds(W2, MD2 - W2), :] = jnp.zeros((MD2 - W2, C), jnp.float32)

    # ---- flatten + Linear(128*P2 -> 2): one strided gather + one matmul + masked reduce ----
    pooled = md2_ref[pl.ds(0, BtP, stride=3), :]                                   # (BtP, C)
    y = jnp.dot(pooled.astype(jnp.bfloat16), wl_ref[...],
                preferred_element_type=jnp.float32)                                # (BtP, 2*Gp)
    e0 = jnp.sum(y * sel_ref[0], axis=1, keepdims=True)                            # (BtP, 1)
    e1 = jnp.sum(y * sel_ref[1], axis=1, keepdims=True)
    pair = jnp.concatenate([e0, e1], axis=1)                                       # (BtP, 2)
    logits = jnp.dot(ind_ref[...], pair, preferred_element_type=jnp.float32)       # (Bt, 2)

    # ---- lane-dense output (128 lanes); bias already padded to 128 lanes host-side ----
    out = jnp.concatenate([logits, jnp.zeros((Bt, 126), jnp.float32)], axis=1)
    o_ref[0] = out + bl_ref[...]


def _fused_forward(xcol, w1t, b1r, w2c, b2r, wl2, blp, sel, ind,
                   *, Bt, Lp, Gq, Gp, K, C):
    nb = xcol.shape[0]
    KC = xcol.shape[2]
    BtL, BtG, BtP = Bt * Lp, Bt * Gq, Bt * Gp
    W1 = BtL - 2
    N2 = BtG - (K - 1)
    MD2 = BtG - 2
    kern = functools.partial(_disc_fused_kernel, Bt=Bt, Lp=Lp, Gq=Gq, Gp=Gp, K=K, C=C)

    flops = int(nb * (2 * BtL * KC * C + 2 * N2 * (K * C) * C
                      + 2 * BtP * C * (2 * Gp) + 2 * Bt * BtP * 2))
    bytes_accessed = int(xcol.size * 2 + w1t.size * 2 + w2c.size * 2 + wl2.size * 2
                         + (b1r.size + b2r.size + blp.size + sel.size + ind.size) * 4
                         + nb * Bt * 128 * 4)

    return pl.pallas_call(
        kern,
        out_shape=jax.ShapeDtypeStruct((nb, Bt, 128), jnp.float32),
        grid=(nb,),
        in_specs=[
            pl.BlockSpec((1, BtL, KC), lambda i: (i, 0, 0)),   # im2col activations (batch-tiled)
            pl.BlockSpec((KC, C), lambda i: (0, 0)),           # weights: resident across steps
            pl.BlockSpec((1, C), lambda i: (0, 0)),
            pl.BlockSpec((K * C, C), lambda i: (0, 0)),
            pl.BlockSpec((1, C), lambda i: (0, 0)),
            pl.BlockSpec((C, 2 * Gp), lambda i: (0, 0)),
            pl.BlockSpec((1, 128), lambda i: (0, 0)),
            pl.BlockSpec((2, BtP, 2 * Gp), lambda i: (0, 0, 0)),
            pl.BlockSpec((Bt, BtP), lambda i: (0, 0)),
        ],
        out_specs=pl.BlockSpec((1, Bt, 128), lambda i: (i, 0, 0)),
        scratch_shapes=[
            pltpu.VMEM((W1, C), jnp.float32),
            pltpu.VMEM((N2, K * C), jnp.bfloat16),
            pltpu.VMEM((MD2, C), jnp.float32),
        ],
        compiler_params=pltpu.CompilerParams(
            dimension_semantics=("parallel",),
            vmem_limit_bytes=48 * 1024 * 1024),
        cost_estimate=pl.CostEstimate(flops=flops, transcendentals=0,
                                      bytes_accessed=bytes_accessed),
    )(xcol, w1t, b1r, w2c, b2r, wl2, blp, sel, ind)


# ---------------------------------- Discriminator -------------------------------- #

class Discriminator:
    PAD = 0          # Constants.PAD
    K = 5            # conv kernel size
    CHANNELS = 128
    _BT_MAX = 32     # max samples per grid step (VMEM at 32 is ~20 MB, well under the limit)

    def __init__(self, n_src_vocab, maxlen, d_word_vec=150, dropout=0.1, key=None):
        key = jax.random.PRNGKey(0) if key is None else key
        ks = jax.random.split(key, 8)
        self.maxlen = maxlen
        self.d_word_vec = d_word_vec

        C, K, L = self.CHANNELS, self.K, d_word_vec

        # nn.Embedding(n_src_vocab, d_word_vec, padding_idx=PAD)
        emb = jax.random.normal(ks[0], (n_src_vocab, d_word_vec), jnp.float32)
        self.emb = emb.at[self.PAD].set(0.0)

        def conv_init(kw, kb, cout, cin, ksz):
            bound = 1.0 / (cin * ksz) ** 0.5
            w = jax.random.uniform(kw, (cout, cin, ksz), jnp.float32, -bound, bound)
            b = jax.random.uniform(kb, (cout,), jnp.float32, -bound, bound)
            return w, b

        self.w1, self.b1 = conv_init(ks[1], ks[2], C, maxlen, K)   # conv1
        self.w2, self.b2 = conv_init(ks[3], ks[4], C, C, K)        # conv2
        self.w3, self.b3 = conv_init(ks[5], ks[6], C, C, K)        # conv3: never reaches output

        # Kernel-friendly weight layouts (hoisted out of forward), bf16 for the MXU:
        #   w1t[k*Cin + c, o] = w1[o, c, k]     (conv1 im2col weight, contraction = K*Cin)
        #   w2c[k*C   + c, o] = w2[o, c, k]     (conv2 im2col weight, contraction = K*C)
        self.w1t = jnp.transpose(self.w1, (2, 1, 0)).reshape(K * maxlen, C).astype(jnp.bfloat16)
        self.b1r = self.b1.reshape(1, C)
        self.w2c = jnp.transpose(self.w2, (2, 1, 0)).reshape(K * C, C).astype(jnp.bfloat16)
        self.b2r = self.b2.reshape(1, C)

        self._lin_key = ks[7]
        self.lin_w = None          # lazily created, as in the torch module
        self.lin_b = None
        self._wl2 = None
        self._blp = None
        self._selind_cache = {}

        # Geometry (valid conv k=5, max_pool1d kernel=stride=3) from the TRUE length L:
        self.P1 = (L - K + 1 - 3) // 3 + 1       # length after pool1 (48 for D=150)
        self.L2 = self.P1 - K + 1                # length after conv2 (44)
        self.P2 = (self.L2 - 3) // 3 + 1         # length after pool2 (14)
        # Padded per-sample row stride: multiple of 9 so every pooled position of every sample
        # lands on a single global stride-3 grid at both pooling levels.
        self.Lp = ((L + 8) // 9) * 9             # 153 for D=150
        self.Gq = self.Lp // 3                   # per-sample stride after pool1 (51)
        self.Gp = self.Gq // 3                   # per-sample stride after pool2 (17)
        # Boundary-garbage isolation (holds for the module's D=150 default).
        assert self.P1 <= self.Gq
        assert self.P2 <= self.Gp
        assert 3 * (self.P2 - 1) <= self.Gq - K - 2

    # lazy nn.Linear(128 * P2, 2)
    def _ensure_linear(self):
        if self.lin_w is not None:
            return
        C, P2, Gp = self.CHANNELS, self.P2, self.Gp
        f_in = C * P2
        kw, kb = jax.random.split(self._lin_key)
        bound = 1.0 / f_in ** 0.5
        self.lin_w = jax.random.uniform(kw, (2, f_in), jnp.float32, -bound, bound)
        self.lin_b = jax.random.uniform(kb, (2,), jnp.float32, -bound, bound)
        # kernel layout: wl2[c, 2*q + o] = lin_w[o, c*P2 + q] for q < P2, zero for q in [P2, Gp)
        w3 = jnp.transpose(self.lin_w.reshape(2, C, P2), (1, 2, 0))          # (C, P2, 2)
        w3 = jnp.pad(w3, ((0, 0), (0, Gp - P2), (0, 0)))                     # (C, Gp, 2)
        self._wl2 = w3.reshape(C, 2 * Gp).astype(jnp.bfloat16)
        self._blp = jnp.pad(self.lin_b.reshape(1, 2), ((0, 0), (0, 126)))    # (1, 128) f32

    # per-Bt constant selection / grouping matrices (resident inputs of the kernel)
    def _sel_ind(self, Bt):
        if Bt in self._selind_cache:
            return self._selind_cache[Bt]
        Gp = self.Gp
        q = jnp.arange(Gp)
        j = jnp.arange(2 * Gp)
        sel_a = (j[None, :] == 2 * q[:, None]).astype(jnp.float32)           # (Gp, 2Gp)
        sel_b = (j[None, :] == 2 * q[:, None] + 1).astype(jnp.float32)
        sel = jnp.stack([jnp.tile(sel_a, (Bt, 1)), jnp.tile(sel_b, (Bt, 1))], axis=0)
        ind = (jnp.arange(Bt * Gp)[None, :] // Gp
               == jnp.arange(Bt)[:, None]).astype(jnp.float32)               # (Bt, Bt*Gp)
        self._selind_cache[Bt] = (sel, ind)
        return sel, ind

    def forward(self, input_sentence, is_softmax=False, dont_pass_emb=False):
        if dont_pass_emb:
            emb = jnp.asarray(input_sentence, jnp.float32)            # (B, maxlen, d_word_vec)
        else:
            emb = jnp.take(self.emb, input_sentence, axis=0)          # gather = layout glue
        B, Cin, L = emb.shape
        assert L == self.d_word_vec
        K, C, Lp, Gq, Gp = self.K, self.CHANNELS, self.Lp, self.Gq, self.Gp
        self._ensure_linear()
        # TODO(synk): nn.Dropout(p=0.1) reproduced as identity (eval mode); conv3/layer3 skipped
        # because only its batch dimension is used by the torch forward.

        # ---- batch tiling: Bt samples per grid step; >= 2 grid steps whenever B >= 2 ----
        Bt = max(1, min(self._BT_MAX, pl.cdiv(B, 2)))
        nb = pl.cdiv(B, Bt)
        B_pad = nb * Bt
        if B_pad != B:
            emb = jnp.pad(emb, ((0, B_pad - B), (0, 0), (0, 0)))

        # ---- host-side im2col (layout glue on the tiny embedding tensor), cast to bf16 ----
        # xcol[n, b*Lp + t, k*Cin + c] = emb[n*Bt + b, c, t + k]  (zero for t + k >= L)
        emb_pp = jnp.pad(emb, ((0, 0), (0, 0), (0, Lp + K - 1 - L)))
        taps = jnp.stack([emb_pp[:, :, k:k + Lp] for k in range(K)], axis=1)  # (B_pad,K,Cin,Lp)
        xcol = (jnp.transpose(taps, (0, 3, 1, 2))
                .reshape(nb, Bt * Lp, K * Cin).astype(jnp.bfloat16))

        sel, ind = self._sel_ind(Bt)
        out = _fused_forward(xcol, self.w1t, self.b1r, self.w2c, self.b2r,
                             self._wl2, self._blp, sel, ind,
                             Bt=Bt, Lp=Lp, Gq=Gq, Gp=Gp, K=K, C=C)
        logit = out.reshape(B_pad, 128)[:B, :2]
        if is_softmax:
            logit = jax.nn.log_softmax(logit, axis=1)                 # nn.LogSoftmax() on 2-D
        return logit


# ------------------------------ pure-JAX reference ------------------------------- #

def _ref_conv1d_relu(x, w, b):
    B, Cin, L = x.shape
    Cout, _, K = w.shape
    Lout = L - K + 1
    out = jnp.zeros((B, Cout, Lout), jnp.float32)
    for k in range(K):
        out = out + jnp.einsum('oc,bcl->bol', w[:, :, k], x[:, :, k:k + Lout])
    return jnp.maximum(out + b[None, :, None], 0.0)


def _ref_pool3(x):
    B, Co, L = x.shape
    P = (L - 3) // 3 + 1
    return x[:, :, :P * 3].reshape(B, Co, P, 3).max(axis=-1)


def _reference_forward(disc, ids):
    emb = jnp.take(disc.emb, ids, axis=0)
    l1 = _ref_pool3(_ref_conv1d_relu(emb, disc.w1, disc.b1))
    l2 = _ref_pool3(_ref_conv1d_relu(l1, disc.w2, disc.b2))
    flat = l2.reshape(l2.shape[0], -1)
    return flat @ disc.lin_w.T + disc.lin_b


# --------------------------------------- main ------------------------------------ #

if __name__ == "__main__":
    key = jax.random.PRNGKey(0)
    k_ids, k_params = jax.random.split(key)

    n_src_vocab, maxlen, d_word_vec, batch = 32, 8, 150, 2
    input_ids = jax.random.randint(k_ids, (batch, maxlen), 0, n_src_vocab, dtype=jnp.int32)

    disc = Discriminator(n_src_vocab, maxlen, d_word_vec, key=k_params)

    logit = disc.forward(input_ids)
    jax.block_until_ready(logit)
    assert logit.shape == (batch, 2), logit.shape
    assert bool(jnp.all(jnp.isfinite(logit)))

    # numerical check against a plain-JAX f32 reference (bf16 MXU operands -> looser tolerance)
    ref = _reference_forward(disc, input_ids)
    assert bool(jnp.allclose(logit, ref, rtol=3e-2, atol=3e-2)), (logit, ref)

    # exercise the log-softmax path once as well
    logp = disc.forward(input_ids, is_softmax=True)
    jax.block_until_ready(logp)
    assert logp.shape == (batch, 2)

    print("KERNEL_OK")
</pallas_src>

<mosaic_0001>
module attributes {stable_mosaic.version = 11 : i64} {
  func.func @_disc_fused_kernel(%arg0: i32, %arg1: memref<1x153x40xbf16, #tpu.memory_space<vmem>>, %arg2: memref<40x128xbf16, #tpu.memory_space<vmem>>, %arg3: memref<1x128xf32, #tpu.memory_space<vmem>>, %arg4: memref<640x128xbf16, #tpu.memory_space<vmem>>, %arg5: memref<1x128xf32, #tpu.memory_space<vmem>>, %arg6: memref<128x34xbf16, #tpu.memory_space<vmem>>, %arg7: memref<1x128xf32, #tpu.memory_space<vmem>>, %arg8: memref<2x17x34xf32, #tpu.memory_space<vmem>>, %arg9: memref<1x17xf32, #tpu.memory_space<vmem>>, %arg10: memref<1x1x128xf32, #tpu.memory_space<vmem>>, %arg11: memref<151x128xf32, #tpu.memory_space<vmem>>, %arg12: memref<47x640xbf16, #tpu.memory_space<vmem>>, %arg13: memref<49x128xf32, #tpu.memory_space<vmem>>) attributes {dimension_semantics = [#tpu.dimension_semantics<parallel>], iteration_bounds = array<i64: 2>, scalar_prefetch = 0 : i64, scratch_operands = 3 : i64, tpu.core_type = #tpu.core_type<tc>, window_params = [{transform_indices = @transform_0, window_bounds = array<i64: 1, 153, 40>}, {pipeline_mode = #tpu.pipeline_mode<synchronous>, transform_indices = @transform_1, window_bounds = array<i64: 40, 128>}, {pipeline_mode = #tpu.pipeline_mode<synchronous>, transform_indices = @transform_2, window_bounds = array<i64: 1, 128>}, {pipeline_mode = #tpu.pipeline_mode<synchronous>, transform_indices = @transform_3, window_bounds = array<i64: 640, 128>}, {pipeline_mode = #tpu.pipeline_mode<synchronous>, transform_indices = @transform_4, window_bounds = array<i64: 1, 128>}, {pipeline_mode = #tpu.pipeline_mode<synchronous>, transform_indices = @transform_5, window_bounds = array<i64: 128, 34>}, {pipeline_mode = #tpu.pipeline_mode<synchronous>, transform_indices = @transform_6, window_bounds = array<i64: 1, 128>}, {pipeline_mode = #tpu.pipeline_mode<synchronous>, transform_indices = @transform_7, window_bounds = array<i64: 2, 17, 34>}, {pipeline_mode = #tpu.pipeline_mode<synchronous>, transform_indices = @transform_8, window_bounds = array<i64: 1, 17>}, {transform_indices = @transform_9, window_bounds = array<i64: 1, 1, 128>}]} {
    %c0 = arith.constant 0 : index
    %c0_0 = arith.constant 0 : index
    %c0_1 = arith.constant 0 : index
    %0 = vector.load %arg1[%c0, %c0_0, %c0_1] : memref<1x153x40xbf16, #tpu.memory_space<vmem>>, vector<1x153x40xbf16>
    %1 = vector.shape_cast %0 : vector<1x153x40xbf16> to vector<153x40xbf16>
    %c0_2 = arith.constant 0 : index
    %c0_3 = arith.constant 0 : index
    %2 = vector.load %arg2[%c0_2, %c0_3] : memref<40x128xbf16, #tpu.memory_space<vmem>>, vector<40x128xbf16>
    %cst = arith.constant dense<0.000000e+00> : vector<153x128xf32>
    %3 = tpu.matmul %1, %2, %cst {dimension_numbers = #tpu.dot_dimension_numbers<[1], [0], [0], [1], [0, 0, 1, 1], [], []>} : vector<153x40xbf16>, vector<40x128xbf16>, vector<153x128xf32> -> vector<153x128xf32>
    %c0_4 = arith.constant 0 : index
    %c0_5 = arith.constant 0 : index
    %4 = vector.load %arg3[%c0_4, %c0_5] : memref<1x128xf32, #tpu.memory_space<vmem>>, vector<1x128xf32>
    %5 = vector.broadcast %4 : vector<1x128xf32> to vector<153x128xf32>
    %6 = arith.addf %3, %5 : vector<153x128xf32>
    %cst_6 = arith.constant 0.000000e+00 : f32
    %7 = vector.broadcast %cst_6 : f32 to vector<153x128xf32>
    %8 = arith.maximumf %6, %7 : vector<153x128xf32>
    %9 = vector.extract_strided_slice %8 {offsets = [0, 0], sizes = [151, 128], strides = [1, 1]} : vector<153x128xf32> to vector<151x128xf32>
    %10 = vector.extract_strided_slice %8 {offsets = [1, 0], sizes = [151, 128], strides = [1, 1]} : vector<153x128xf32> to vector<151x128xf32>
    %11 = arith.maximumf %9, %10 : vector<151x128xf32>
    %12 = vector.extract_strided_slice %8 {offsets = [2, 0], sizes = [151, 128], strides = [1, 1]} : vector<153x128xf32> to vector<151x128xf32>
    %13 = arith.maximumf %11, %12 : vector<151x128xf32>
    %c0_7 = arith.constant 0 : index
    %c0_8 = arith.constant 0 : index
    %14 = vector.load %arg11[%c0_7, %c0_8] : memref<151x128xf32, #tpu.memory_space<vmem>>, vector<151x128xf32>
    tpu.vector_store %arg11[%c0_7, %c0_8], %13 {strides = array<i32>} : memref<151x128xf32, #tpu.memory_space<vmem>>, vector<151x128xf32>,
    %c0_9 = arith.constant 0 : index
    %c0_10 = arith.constant 0 : index
    %15 = tpu.strided_load %arg11[%c0_9, %c0_10] {strides = array<i32: 3, 1>} : memref<151x128xf32, #tpu.memory_space<vmem>>, vector<47x128xf32>
    %16 = arith.truncf %15 : vector<47x128xf32> to vector<47x128xbf16>
    %c0_11 = arith.constant 0 : index
    %c0_12 = arith.constant 0 : index
    %17 = vector.load %arg12[%c0_11, %c0_12] : memref<47x640xbf16, #tpu.memory_space<vmem>>, vector<47x128xbf16>
    tpu.vector_store %arg12[%c0_11, %c0_12], %16 {strides = array<i32>} : memref<47x640xbf16, #tpu.memory_space<vmem>>, vector<47x128xbf16>,
    %c3 = arith.constant 3 : index
    %c0_13 = arith.constant 0 : index
    %18 = tpu.strided_load %arg11[%c3, %c0_13] {strides = array<i32: 3, 1>} : memref<151x128xf32, #tpu.memory_space<vmem>>, vector<47x128xf32>
    %19 = arith.truncf %18 : vector<47x128xf32> to vector<47x128xbf16>
    %c0_14 = arith.constant 0 : index
    %c128 = arith.constant 128 : index
    %20 = vector.load %arg12[%c0_14, %c128] : memref<47x640xbf16, #tpu.memory_space<vmem>>, vector<47x128xbf16>
    tpu.vector_store %arg12[%c0_14, %c128], %19 {strides = array<i32>} : memref<47x640xbf16, #tpu.memory_space<vmem>>, vector<47x128xbf16>,
    %c6 = arith.constant 6 : index
    %c0_15 = arith.constant 0 : index
    %21 = tpu.strided_load %arg11[%c6, %c0_15] {strides = array<i32: 3, 1>} : memref<151x128xf32, #tpu.memory_space<vmem>>, vector<47x128xf32>
    %22 = arith.truncf %21 : vector<47x128xf32> to vector<47x128xbf16>
    %c0_16 = arith.constant 0 : index
    %c256 = arith.constant 256 : index
    %23 = vector.load %arg12[%c0_16, %c256] : memref<47x640xbf16, #tpu.memory_space<vmem>>, vector<47x128xbf16>
    tpu.vector_store %arg12[%c0_16, %c256], %22 {strides = array<i32>} : memref<47x640xbf16, #tpu.memory_space<vmem>>, vector<47x128xbf16>,
    %c9 = arith.constant 9 : index
    %c0_17 = arith.constant 0 : index
    %24 = tpu.strided_load %arg11[%c9, %c0_17] {strides = array<i32: 3, 1>} : memref<151x128xf32, #tpu.memory_space<vmem>>, vector<47x128xf32>
    %25 = arith.truncf %24 : vector<47x128xf32> to vector<47x128xbf16>
    %c0_18 = arith.constant 0 : index
    %c384 = arith.constant 384 : index
    %26 = vector.load %arg12[%c0_18, %c384] : memref<47x640xbf16, #tpu.memory_space<vmem>>, vector<47x128xbf16>
    tpu.vector_store %arg12[%c0_18, %c384], %25 {strides = array<i32>} : memref<47x640xbf16, #tpu.memory_space<vmem>>, vector<47x128xbf16>,
    %c12 = arith.constant 12 : index
    %c0_19 = arith.constant 0 : index
    %27 = tpu.strided_load %arg11[%c12, %c0_19] {strides = array<i32: 3, 1>} : memref<151x128xf32, #tpu.memory_space<vmem>>, vector<47x128xf32>
    %28 = arith.truncf %27 : vector<47x128xf32> to vector<47x128xbf16>
    %c0_20 = arith.constant 0 : index
    %c512 = arith.constant 512 : index
    %29 = vector.load %arg12[%c0_20, %c512] : memref<47x640xbf16, #tpu.memory_space<vmem>>, vector<47x128xbf16>
    tpu.vector_store %arg12[%c0_20, %c512], %28 {strides = array<i32>} : memref<47x640xbf16, #tpu.memory_space<vmem>>, vector<47x128xbf16>,
    %c0_21 = arith.constant 0 : index
    %c0_22 = arith.constant 0 : index
    %30 = vector.load %arg12[%c0_21, %c0_22] : memref<47x640xbf16, #tpu.memory_space<vmem>>, vector<47x640xbf16>
    %c0_23 = arith.constant 0 : index
    %c0_24 = arith.constant 0 : index
    %31 = vector.load %arg4[%c0_23, %c0_24] : memref<640x128xbf16, #tpu.memory_space<vmem>>, vector<640x128xbf16>
    %cst_25 = arith.constant dense<0.000000e+00> : vector<47x128xf32>
    %32 = tpu.matmul %30, %31, %cst_25 {dimension_numbers = #tpu.dot_dimension_numbers<[1], [0], [0], [1], [0, 0, 1, 1], [], []>} : vector<47x640xbf16>, vector<640x128xbf16>, vector<47x128xf32> -> vector<47x128xf32>
    %c0_26 = arith.constant 0 : index
    %c0_27 = arith.constant 0 : index
    %33 = vector.load %arg5[%c0_26, %c0_27] : memref<1x128xf32, #tpu.memory_space<vmem>>, vector<1x128xf32>
    %34 = vector.broadcast %33 : vector<1x128xf32> to vector<47x128xf32>
    %35 = arith.addf %32, %34 : vector<47x128xf32>
    %cst_28 = arith.constant 0.000000e+00 : f32
    %36 = vector.broadcast %cst_28 : f32 to vector<47x128xf32>
    %37 = arith.maximumf %35, %36 : vector<47x128xf32>
    %38 = vector.extract_strided_slice %37 {offsets = [0, 0], sizes = [45, 128], strides = [1, 1]} : vector<47x128xf32> to vector<45x128xf32>
    %39 = vector.extract_strided_slice %37 {offsets = [1, 0], sizes = [45, 128], strides = [1, 1]} : vector<47x128xf32> to vector<45x128xf32>
    %40 = arith.maximumf %38, %39 : vector<45x128xf32>
    %41 = vector.extract_strided_slice %37 {offsets = [2, 0], sizes = [45, 128], strides = [1, 1]} : vector<47x128xf32> to vector<45x128xf32>
    %42 = arith.maximumf %40, %41 : vector<45x128xf32>
    %c0_29 = arith.constant 0 : index
    %c0_30 = arith.constant 0 : index
    %43 = vector.load %arg13[%c0_29, %c0_30] : memref<49x128xf32, #tpu.memory_space<vmem>>, vector<45x128xf32>
    tpu.vector_store %arg13[%c0_29, %c0_30], %42 {strides = array<i32>} : memref<49x128xf32, #tpu.memory_space<vmem>>, vector<45x128xf32>,
    %cst_31 = arith.constant 0.000000e+00 : f32
    %44 = vector.broadcast %cst_31 : f32 to vector<4x128xf32>
    %c45 = arith.constant 45 : index
    %c0_32 = arith.constant 0 : index
    %45 = vector.load %arg13[%c45, %c0_32] : memref<49x128xf32, #tpu.memory_space<vmem>>, vector<4x128xf32>
    tpu.vector_store %arg13[%c45, %c0_32], %44 {strides = array<i32>} : memref<49x128xf32, #tpu.memory_space<vmem>>, vector<4x128xf32>,
    %c0_33 = arith.constant 0 : index
    %c0_34 = arith.constant 0 : index
    %46 = tpu.strided_load %arg13[%c0_33, %c0_34] {strides = array<i32: 3, 1>} : memref<49x128xf32, #tpu.memory_space<vmem>>, vector<17x128xf32>
    %47 = arith.truncf %46 : vector<17x128xf32> to vector<17x128xbf16>
    %c0_35 = arith.constant 0 : index
    %c0_36 = arith.constant 0 : index
    %48 = vector.load %arg6[%c0_35, %c0_36] : memref<128x34xbf16, #tpu.memory_space<vmem>>, vector<128x34xbf16>
    %cst_37 = arith.constant dense<0.000000e+00> : vector<17x34xf32>
    %49 = tpu.matmul %47, %48, %cst_37 {dimension_numbers = #tpu.dot_dimension_numbers<[1], [0], [0], [1], [0, 0, 1, 1], [], []>} : vector<17x128xbf16>, vector<128x34xbf16>, vector<17x34xf32> -> vector<17x34xf32>
    %c0_38 = arith.constant 0 : index
    %c0_39 = arith.constant 0 : index
    %c0_40 = arith.constant 0 : index
    %50 = vector.load %arg8[%c0_38, %c0_39, %c0_40] : memref<2x17x34xf32, #tpu.memory_space<vmem>>, vector<1x17x34xf32>
    %51 = vector.shape_cast %50 : vector<1x17x34xf32> to vector<17x34xf32>
    %52 = arith.mulf %49, %51 : vector<17x34xf32>
    %cst_41 = arith.constant dense<0.000000e+00> : vector<17xf32>
    %53 = vector.multi_reduction <add>, %52, %cst_41 [1] : vector<17x34xf32> to vector<17xf32>
    %54 = vector.shape_cast %53 : vector<17xf32> to vector<17x1xf32>
    %c1 = arith.constant 1 : index
    %c0_42 = arith.constant 0 : index
    %c0_43 = arith.constant 0 : index
    %55 = vector.load %arg8[%c1, %c0_42, %c0_43] : memref<2x17x34xf32, #tpu.memory_space<vmem>>, vector<1x17x34xf32>
    %56 = vector.shape_cast %55 : vector<1x17x34xf32> to vector<17x34xf32>
    %57 = arith.mulf %49, %56 : vector<17x34xf32>
    %cst_44 = arith.constant dense<0.000000e+00> : vector<17xf32>
    %58 = vector.multi_reduction <add>, %57, %cst_44 [1] : vector<17x34xf32> to vector<17xf32>
    %59 = vector.shape_cast %58 : vector<17xf32> to vector<17x1xf32>
    %60 = tpu.concatenate %54, %59 in 1 : vector<17x1xf32>, vector<17x1xf32> -> vector<17x2xf32>
    %c0_45 = arith.constant 0 : index
    %c0_46 = arith.constant 0 : index
    %61 = vector.load %arg9[%c0_45, %c0_46] : memref<1x17xf32, #tpu.memory_space<vmem>>, vector<1x17xf32>
    %cst_47 = arith.constant dense<0.000000e+00> : vector<1x2xf32>
    %62 = tpu.matmul %61, %60, %cst_47 {dimension_numbers = #tpu.dot_dimension_numbers<[1], [0], [0], [1], [0, 0, 1, 1], [], []>} : vector<1x17xf32>, vector<17x2xf32>, vector<1x2xf32> -> vector<1x2xf32>
    %cst_48 = arith.constant 0.000000e+00 : f32
    %63 = vector.broadcast %cst_48 : f32 to vector<1x126xf32>
    %64 = tpu.concatenate %62, %63 in 1 : vector<1x2xf32>, vector<1x126xf32> -> vector<1x128xf32>
    %c0_49 = arith.constant 0 : index
    %c0_50 = arith.constant 0 : index
    %65 = vector.load %arg7[%c0_49, %c0_50] : memref<1x128xf32, #tpu.memory_space<vmem>>, vector<1x128xf32>
    %66 = arith.addf %64, %65 : vector<1x128xf32>
    %c0_51 = arith.constant 0 : index
    %c0_52 = arith.constant 0 : index
    %c0_53 = arith.constant 0 : index
    %67 = vector.load %arg10[%c0_51, %c0_52, %c0_53] : memref<1x1x128xf32, #tpu.memory_space<vmem>>, vector<1x1x128xf32>
    %68 = vector.shape_cast %67 : vector<1x1x128xf32> to vector<1x128xf32>
    %69 = vector.shape_cast %66 : vector<1x128xf32> to vector<1x1x128xf32>
    tpu.vector_store %arg10[%c0_51, %c0_52, %c0_53], %69 {strides = array<i32>} : memref<1x1x128xf32, #tpu.memory_space<vmem>>, vector<1x1x128xf32>,
    return
  }
  func.func @transform_0(%arg0: i32) -> (i32, i32, i32) {
    %c0_i32 = arith.constant 0 : i32
    %c0_i32_0 = arith.constant 0 : i32
    %c0_i32_1 = arith.constant 0 : i32
    return %arg0, %c0_i32, %c0_i32_0 : i32, i32, i32
  }
  func.func @transform_1(%arg0: i32) -> (i32, i32) {
    %c0_i32 = arith.constant 0 : i32
    %c0_i32_0 = arith.constant 0 : i32
    %c0_i32_1 = arith.constant 0 : i32
    return %c0_i32, %c0_i32_0 : i32, i32
  }
  func.func @transform_2(%arg0: i32) -> (i32, i32) {
    %c0_i32 = arith.constant 0 : i32
    %c0_i32_0 = arith.constant 0 : i32
    %c0_i32_1 = arith.constant 0 : i32
    return %c0_i32, %c0_i32_0 : i32, i32
  }
  func.func @transform_3(%arg0: i32) -> (i32, i32) {
    %c0_i32 = arith.constant 0 : i32
    %c0_i32_0 = arith.constant 0 : i32
    %c0_i32_1 = arith.constant 0 : i32
    return %c0_i32, %c0_i32_0 : i32, i32
  }
  func.func @transform_4(%arg0: i32) -> (i32, i32) {
    %c0_i32 = arith.constant 0 : i32
    %c0_i32_0 = arith.constant 0 : i32
    %c0_i32_1 = arith.constant 0 : i32
    return %c0_i32, %c0_i32_0 : i32, i32
  }
  func.func @transform_5(%arg0: i32) -> (i32, i32) {
    %c0_i32 = arith.constant 0 : i32
    %c0_i32_0 = arith.constant 0 : i32
    %c0_i32_1 = arith.constant 0 : i32
    return %c0_i32, %c0_i32_0 : i32, i32
  }
  func.func @transform_6(%arg0: i32) -> (i32, i32) {
    %c0_i32 = arith.constant 0 : i32
    %c0_i32_0 = arith.constant 0 : i32
    %c0_i32_1 = arith.constant 0 : i32
    return %c0_i32, %c0_i32_0 : i32, i32
  }
  func.func @transform_7(%arg0: i32) -> (i32, i32, i32) {
    %c0_i32 = arith.constant 0 : i32
    %c0_i32_0 = arith.constant 0 : i32
    %c0_i32_1 = arith.constant 0 : i32
    %c0_i32_2 = arith.constant 0 : i32
    return %c0_i32, %c0_i32_0, %c0_i32_1 : i32, i32, i32
  }
  func.func @transform_8(%arg0: i32) -> (i32, i32) {
    %c0_i32 = arith.constant 0 : i32
    %c0_i32_0 = arith.constant 0 : i32
    %c0_i32_1 = arith.constant 0 : i32
    return %c0_i32, %c0_i32_0 : i32, i32
  }
  func.func @transform_9(%arg0: i32) -> (i32, i32, i32) {
    %c0_i32 = arith.constant 0 : i32
    %c0_i32_0 = arith.constant 0 : i32
    %c0_i32_1 = arith.constant 0 : i32
    return %arg0, %c0_i32, %c0_i32_0 : i32, i32, i32
  }
}

</mosaic_0001>

<llo_original>
// kernel: tpu_custom_call.1
$region0: #{tpu_custom_call.1}
  #allocation0 [shape = 'u32[]', space=smem, size = 0x4, offset = 0x4, fixed_abs, tag = 'smem constant byte address 0x4 - core index']
  #allocation1 [shape = 'u32[72,128]{1,0:T(1,128)}', space=vmem, size = 0x9000, scoped, tag = 'internal scratch']
  #allocation2 [shape = 'f32[151,128]{1,0:T(8,128)}', space=vmem, size = 0x13000, scoped, tag = 'scratch operand']
  #allocation3 [shape = 'bf16[47,640]{1,0:T(8,128)(2,1)}', space=vmem, size = 0xf000, scoped, tag = 'scratch operand']
  #allocation4 [shape = 'f32[49,128]{1,0:T(8,128)}', space=vmem, size = 0x7000, scoped, tag = 'scratch operand']
  %s0 = inlined_call_operand.vmem [shape: bf16[2,153,40], index: 0, kind: input, shape index: {}]
  %s1 = inlined_call_operand.vmem [shape: bf16[40,128], index: 1, kind: input, shape index: {}]
  %s2 = inlined_call_operand.vmem [shape: f32[1,128], index: 2, kind: input, shape index: {}]
  %s3 = inlined_call_operand.vmem [shape: bf16[640,128], index: 3, kind: input, shape index: {}]
  %s4 = inlined_call_operand.vmem [shape: f32[1,128], index: 4, kind: input, shape index: {}]
  %s5 = inlined_call_operand.vmem [shape: bf16[128,34], index: 5, kind: input, shape index: {}]
  %s6 = inlined_call_operand.vmem [shape: f32[1,128], index: 6, kind: input, shape index: {}]
  %s7 = inlined_call_operand.vmem [shape: f32[2,17,34], index: 7, kind: input, shape index: {}]
  %s8 = inlined_call_operand.vmem [shape: f32[1,17], index: 8, kind: input, shape index: {}]
  %s9 = inlined_call_operand.hbm [shape: f32[2,1,128], index: 9, kind: output, shape index: {}]
  %s10 = sld [smem:[#allocation0]]
  $region69: #{tpu_custom_call.1} parent=0
    _
  %s12 = ssub.s32 1, %s10
  %s13 = scalar_select 0, %s12, %s10
  $region1: #{tpu_custom_call.1} parent=0
    #allocation5 [shape = 'u8[1024]{0}', space=vmem, size = 0x400, scoped, tag = 'output window, operand 0']
    #allocation6 [shape = 's32[2]{0}', space=sflag, size = 0x8, scoped, tag = 'scoped memory for tpu_custom_call.1']
    %14 = vsyncpa [#allocation6], 0
    %s15 = scalar_lea.sflag [#allocation6], 1
    %16 = vsyncpa %s15, 0
    loop: start=0, step=1, limit=4
    $region2: #{tpu_custom_call.1} parent=1 // loop_pre_header
      _
    $region3: #{tpu_custom_call.1} parent=1 // loop_header
      %s18 = sphi 0, %s22
      %p19 = scmp.ge.s32.totalorder %s18, 4
      %s28 = sphi 0, %s30
      %s31 = sphi 0, %s28
      %s32 = sphi 0, %s31
      %s48 = sphi 0, %s32
      %s52 = sphi 0, %s52
      %s54 = sphi 0, %s52
      %s55 = sphi 0, %s54
      %s69 = sphi 0, %s55
      %s73 = sphi 0, %s73
      %s75 = sphi 0, %s73
      %s76 = sphi 0, %s75
      %s90 = sphi 0, %s76
      %s94 = sphi 0, %s94
      %s96 = sphi 0, %s94
      %s97 = sphi 0, %s96
      %s111 = sphi 0, %s97
      %s115 = sphi 0, %s115
      %s117 = sphi 0, %s115
      %s118 = sphi 0, %s117
      %s132 = sphi 0, %s118
      %s136 = sphi 0, %s136
      %s138 = sphi 0, %s136
      %s139 = sphi 0, %s138
      %s153 = sphi 0, %s139
      %s157 = sphi 0, %s157
      %s159 = sphi 0, %s157
      %s160 = sphi 0, %s159
      %s174 = sphi 0, %s160
      %s178 = sphi 0, %s178
      %s180 = sphi 0, %s178
      %s181 = sphi 0, %s180
      %s195 = sphi 0, %s181
      %s199 = sphi 0, %s199
      %s201 = sphi 0, %s199
      %s202 = sphi 0, %s201
      %s216 = sphi 0, %s202
      %s222 = sphi 0, %s224
      %s225 = sphi 0, %s222
      %s226 = sphi 0, %s225
      %s242 = sphi 0, %s226
    $region4: #{tpu_custom_call.1} parent=1 // loop_header_branch
      %21 = sbr.rel (%p19) target = $region8
    $region5: #{tpu_custom_call.1} parent=1 // loop_body
      %s23 = ssub.s32 %s18, 1
      %s24 = ssub.s32 %s18, 2
      %s25 = sadd.s32 %s18, 1
      %s26 = ssub.s32 %s18, %s25
      %p27 = scmp.eq.s32.totalorder %s26, 0
      %s29 = sadd.s32 %s28, 1
      %s30 = scalar_select %p27, %s28, %s29
      %p33 = pneg %p27
      %p34 = scmp.eq.s32.totalorder %s18, 1
      %p35 = por %p33, %p34
      %p36 = scmp.ne.s32.totalorder %s28, %s31
      %p37 = scmp.eq.s32.totalorder %s18, 0
      %p38 = por %p36, %p37
      %p39 = scmp.ne.s32.totalorder %s28, %s31
      %p40 = scmp.eq.s32.totalorder %s23, 1
      %p41 = por %p39, %p40
      %p42 = scmp.ne.s32.totalorder %s31, %s32
      %p43 = scmp.eq.s32.totalorder %s23, 0
      %p44 = por %p42, %p43
      %p45 = scmp.ne.s32.totalorder %s31, %s32
      %p46 = scmp.eq.s32.totalorder %s24, 1
      %p47 = por %p45, %p46
      %p49 = scmp.ne.s32.totalorder %s32, %s48
      %p50 = scmp.eq.s32.totalorder %s24, 0
      %p51 = por %p49, %p50
      %s53 = sadd.s32 %s52, 1
      %p56 = scmp.eq.s32.totalorder %s18, 1
      %p57 = scmp.ne.s32.totalorder %s52, %s54
      %p58 = scmp.eq.s32.totalorder %s18, 0
      %p59 = por %p57, %p58
      %p60 = scmp.ne.s32.totalorder %s52, %s54
      %p61 = scmp.eq.s32.totalorder %s23, 1
      %p62 = por %p60, %p61
      %p63 = scmp.ne.s32.totalorder %s54, %s55
      %p64 = scmp.eq.s32.totalorder %s23, 0
      %p65 = por %p63, %p64
      %p66 = scmp.ne.s32.totalorder %s54, %s55
      %p67 = scmp.eq.s32.totalorder %s24, 1
      %p68 = por %p66, %p67
      %p70 = scmp.ne.s32.totalorder %s55, %s69
      %p71 = scmp.eq.s32.totalorder %s24, 0
      %p72 = por %p70, %p71
      %s74 = sadd.s32 %s73, 1
      %p77 = scmp.eq.s32.totalorder %s18, 1
      %p78 = scmp.ne.s32.totalorder %s73, %s75
      %p79 = scmp.eq.s32.totalorder %s18, 0
      %p80 = por %p78, %p79
      %p81 = scmp.ne.s32.totalorder %s73, %s75
      %p82 = scmp.eq.s32.totalorder %s23, 1
      %p83 = por %p81, %p82
      %p84 = scmp.ne.s32.totalorder %s75, %s76
      %p85 = scmp.eq.s32.totalorder %s23, 0
      %p86 = por %p84, %p85
      %p87 = scmp.ne.s32.totalorder %s75, %s76
      %p88 = scmp.eq.s32.totalorder %s24, 1
      %p89 = por %p87, %p88
      %p91 = scmp.ne.s32.totalorder %s76, %s90
      %p92 = scmp.eq.s32.totalorder %s24, 0
      %p93 = por %p91, %p92
      %s95 = sadd.s32 %s94, 1
      %p98 = scmp.eq.s32.totalorder %s18, 1
      %p99 = scmp.ne.s32.totalorder %s94, %s96
      %p100 = scmp.eq.s32.totalorder %s18, 0
      %p101 = por %p99, %p100
      %p102 = scmp.ne.s32.totalorder %s94, %s96
      %p103 = scmp.eq.s32.totalorder %s23, 1
      %p104 = por %p102, %p103
      %p105 = scmp.ne.s32.totalorder %s96, %s97
      %p106 = scmp.eq.s32.totalorder %s23, 0
      %p107 = por %p105, %p106
      %p108 = scmp.ne.s32.totalorder %s96, %s97
      %p109 = scmp.eq.s32.totalorder %s24, 1
      %p110 = por %p108, %p109
      %p112 = scmp.ne.s32.totalorder %s97, %s111
      %p113 = scmp.eq.s32.totalorder %s24, 0
      %p114 = por %p112, %p113
      %s116 = sadd.s32 %s115, 1
      %p119 = scmp.eq.s32.totalorder %s18, 1
      %p120 = scmp.ne.s32.totalorder %s115, %s117
      %p121 = scmp.eq.s32.totalorder %s18, 0
      %p122 = por %p120, %p121
      %p123 = scmp.ne.s32.totalorder %s115, %s117
      %p124 = scmp.eq.s32.totalorder %s23, 1
      %p125 = por %p123, %p124
      %p126 = scmp.ne.s32.totalorder %s117, %s118
      %p127 = scmp.eq.s32.totalorder %s23, 0
      %p128 = por %p126, %p127
      %p129 = scmp.ne.s32.totalorder %s117, %s118
      %p130 = scmp.eq.s32.totalorder %s24, 1
      %p131 = por %p129, %p130
      %p133 = scmp.ne.s32.totalorder %s118, %s132
      %p134 = scmp.eq.s32.totalorder %s24, 0
      %p135 = por %p133, %p134
      %s137 = sadd.s32 %s136, 1
      %p140 = scmp.eq.s32.totalorder %s18, 1
      %p141 = scmp.ne.s32.totalorder %s136, %s138
      %p142 = scmp.eq.s32.totalorder %s18, 0
      %p143 = por %p141, %p142
      %p144 = scmp.ne.s32.totalorder %s136, %s138
      %p145 = scmp.eq.s32.totalorder %s23, 1
      %p146 = por %p144, %p145
      %p147 = scmp.ne.s32.totalorder %s138, %s139
      %p148 = scmp.eq.s32.totalorder %s23, 0
      %p149 = por %p147, %p148
      %p150 = scmp.ne.s32.totalorder %s138, %s139
      %p151 = scmp.eq.s32.totalorder %s24, 1
      %p152 = por %p150, %p151
      %p154 = scmp.ne.s32.totalorder %s139, %s153
      %p155 = scmp.eq.s32.totalorder %s24, 0
      %p156 = por %p154, %p155
      %s158 = sadd.s32 %s157, 1
      %p161 = scmp.eq.s32.totalorder %s18, 1
      %p162 = scmp.ne.s32.totalorder %s157, %s159
      %p163 = scmp.eq.s32.totalorder %s18, 0
      %p164 = por %p162, %p163
      %p165 = scmp.ne.s32.totalorder %s157, %s159
      %p166 = scmp.eq.s32.totalorder %s23, 1
      %p167 = por %p165, %p166
      %p168 = scmp.ne.s32.totalorder %s159, %s160
      %p169 = scmp.eq.s32.totalorder %s23, 0
      %p170 = por %p168, %p169
      %p171 = scmp.ne.s32.totalorder %s159, %s160
      %p172 = scmp.eq.s32.totalorder %s24, 1
      %p173 = por %p171, %p172
      %p175 = scmp.ne.s32.totalorder %s160, %s174
      %p176 = scmp.eq.s32.totalorder %s24, 0
      %p177 = por %p175, %p176
      %s179 = sadd.s32 %s178, 1
      %p182 = scmp.eq.s32.totalorder %s18, 1
      %p183 = scmp.ne.s32.totalorder %s178, %s180
      %p184 = scmp.eq.s32.totalorder %s18, 0
      %p185 = por %p183, %p184
      %p186 = scmp.ne.s32.totalorder %s178, %s180
      %p187 = scmp.eq.s32.totalorder %s23, 1
      %p188 = por %p186, %p187
      %p189 = scmp.ne.s32.totalorder %s180, %s181
      %p190 = scmp.eq.s32.totalorder %s23, 0
      %p191 = por %p189, %p190
      %p192 = scmp.ne.s32.totalorder %s180, %s181
      %p193 = scmp.eq.s32.totalorder %s24, 1
      %p194 = por %p192, %p193
      %p196 = scmp.ne.s32.totalorder %s181, %s195
      %p197 = scmp.eq.s32.totalorder %s24, 0
      %p198 = por %p196, %p197
      %s200 = sadd.s32 %s199, 1
      %p203 = scmp.eq.s32.totalorder %s18, 1
      %p204 = scmp.ne.s32.totalorder %s199, %s201
      %p205 = scmp.eq.s32.totalorder %s18, 0
      %p206 = por %p204, %p205
      %p207 = scmp.ne.s32.totalorder %s199, %s201
      %p208 = scmp.eq.s32.totalorder %s23, 1
      %p209 = por %p207, %p208
      %p210 = scmp.ne.s32.totalorder %s201, %s202
      %p211 = scmp.eq.s32.totalorder %s23, 0
      %p212 = por %p210, %p211
      %p213 = scmp.ne.s32.totalorder %s201, %s202
      %p214 = scmp.eq.s32.totalorder %s24, 1
      %p215 = por %p213, %p214
      %p217 = scmp.ne.s32.totalorder %s202, %s216
      %p218 = scmp.eq.s32.totalorder %s24, 0
      %p219 = por %p217, %p218
      %s220 = ssub.s32 %s18, %s25
      %p221 = scmp.eq.s32.totalorder %s220, 0
      %s223 = sadd.s32 %s222, 1
      %s224 = scalar_select %p221, %s222, %s223
      %p227 = pneg %p221
      %p228 = scmp.eq.s32.totalorder %s18, 1
      %p229 = por %p227, %p228
      %p230 = scmp.ne.s32.totalorder %s222, %s225
      %p231 = scmp.eq.s32.totalorder %s18, 0
      %p232 = por %p230, %p231
      %p233 = scmp.ne.s32.totalorder %s222, %s225
      %p234 = scmp.eq.s32.totalorder %s23, 1
      %p235 = por %p233, %p234
      %p236 = scmp.ne.s32.totalorder %s225, %s226
      %p237 = scmp.eq.s32.totalorder %s23, 0
      %p238 = por %p236, %p237
      %p239 = scmp.ne.s32.totalorder %s225, %s226
      %p240 = scmp.eq.s32.totalorder %s24, 1
      %p241 = por %p239, %p240
      %p243 = scmp.ne.s32.totalorder %s226, %s242
      %p244 = scmp.eq.s32.totalorder %s24, 0
      %p245 = por %p243, %p244
      %p246 = scmp.le.s32.totalorder 1, %s18
      %p247 = scmp.lt.s32.totalorder %s18, 3
      %p248 = pnand %p246, %p247
      %p249 = pneg %p248
      // Predicated region
      $region9: #{tpu_custom_call.1} parent=5 // pred_check
        _
      $region10: #{tpu_custom_call.1} parent=5 // pred_check_branch
        %251 = sbr.rel (%p248) target = $region12
      $region11: #{tpu_custom_call.1} parent=5 // pred_region
        %s252 = ssub.s32 %s18, 1
        // Predicated region
        $region13: #{tpu_custom_call.1} parent=11 // pred_check
          %p253 = pneg %p65
        $region14: #{tpu_custom_call.1} parent=11 // pred_check_branch
          %255 = sbr.rel (%p253) target = $region16
        $region15: #{tpu_custom_call.1} parent=11 // pred_region
          _
        $region16: #{tpu_custom_call.1} parent=11 // pred_fallthru
          _
        // Predicated region
        $region17: #{tpu_custom_call.1} parent=11 // pred_check
          %p256 = pneg %p86
        $region18: #{tpu_custom_call.1} parent=11 // pred_check_branch
          %258 = sbr.rel (%p256) target = $region20
        $region19: #{tpu_custom_call.1} parent=11 // pred_region
          _
        $region20: #{tpu_custom_call.1} parent=11 // pred_fallthru
          _
        // Predicated region
        $region21: #{tpu_custom_call.1} parent=11 // pred_check
          %p259 = pneg %p107
        $region22: #{tpu_custom_call.1} parent=11 // pred_check_branch
          %261 = sbr.rel (%p259) target = $region24
        $region23: #{tpu_custom_call.1} parent=11 // pred_region
          _
        $region24: #{tpu_custom_call.1} parent=11 // pred_fallthru
          _
        // Predicated region
        $region25: #{tpu_custom_call.1} parent=11 // pred_check
          %p262 = pneg %p128
        $region26: #{tpu_custom_call.1} parent=11 // pred_check_branch
          %264 = sbr.rel (%p262) target = $region28
        $region27: #{tpu_custom_call.1} parent=11 // pred_region
          _
        $region28: #{tpu_custom_call.1} parent=11 // pred_fallthru
          _
        // Predicated region
        $region29: #{tpu_custom_call.1} parent=11 // pred_check
          %p265 = pneg %p149
        $region30: #{tpu_custom_call.1} parent=11 // pred_check_branch
          %267 = sbr.rel (%p265) target = $region32
        $region31: #{tpu_custom_call.1} parent=11 // pred_region
          _
        $region32: #{tpu_custom_call.1} parent=11 // pred_fallthru
          _
        // Predicated region
        $region33: #{tpu_custom_call.1} parent=11 // pred_check
          %p268 = pneg %p170
        $region34: #{tpu_custom_call.1} parent=11 // pred_check_branch
          %270 = sbr.rel (%p268) target = $region36
        $region35: #{tpu_custom_call.1} parent=11 // pred_region
          _
        $region36: #{tpu_custom_call.1} parent=11 // pred_fallthru
          _
        // Predicated region
        $region37: #{tpu_custom_call.1} parent=11 // pred_check
          %p271 = pneg %p191
        $region38: #{tpu_custom_call.1} parent=11 // pred_check_branch
          %273 = sbr.rel (%p271) target = $region40
        $region39: #{tpu_custom_call.1} parent=11 // pred_region
          _
        $region40: #{tpu_custom_call.1} parent=11 // pred_fallthru
          _
        // Predicated region
        $region41: #{tpu_custom_call.1} parent=11 // pred_check
          %p274 = pneg %p212
        $region42: #{tpu_custom_call.1} parent=11 // pred_check_branch
          %276 = sbr.rel (%p274) target = $region44
        $region43: #{tpu_custom_call.1} parent=11 // pred_region
          _
        $region44: #{tpu_custom_call.1} parent=11 // pred_fallthru
          _
      $region12: #{tpu_custom_call.1} parent=5 // pred_fallthru
        _
      %p277 = scmp.lt.s32.totalorder %s18, 2
      // Predicated region
      $region45: #{tpu_custom_call.1} parent=5 // pred_check
        %p278 = pneg %p277
      $region46: #{tpu_custom_call.1} parent=5 // pred_check_branch
        %280 = sbr.rel (%p278) target = $region48
      $region47: #{tpu_custom_call.1} parent=5 // pred_region
        // Predicated region
        $region49: #{tpu_custom_call.1} parent=47 // pred_check
          %p281 = pneg %p38
        $region50: #{tpu_custom_call.1} parent=47 // pred_check_branch
          %283 = sbr.rel (%p281) target = $region52
        $region51: #{tpu_custom_call.1} parent=47 // pred_region
          %p284 = scmp.lt.s32.totalorder %s18, 1
          %s285 = scalar_select %p284, %s18, 1
          %s286 = smul.addr %s285, 20
          %s287 = smul.addr %s286, 4
          %s288 = scalar_lea.vmem %s0, %s287
        $region52: #{tpu_custom_call.1} parent=47 // pred_fallthru
          _
      $region48: #{tpu_custom_call.1} parent=5 // pred_fallthru
        _
      %p289 = scmp.le.s32.totalorder 1, %s18
      %p290 = scmp.lt.s32.totalorder %s18, 3
      %p291 = pnand %p289, %p290
      %p292 = pneg %p291
      // Predicated region
      $region53: #{tpu_custom_call.1} parent=5 // pred_check
        _
      $region54: #{tpu_custom_call.1} parent=5 // pred_check_branch
        %294 = sbr.rel (%p291) target = $region56
      $region55: #{tpu_custom_call.1} parent=5 // pred_region
        %s295 = ssub.s32 %s18, 1
        %p296 = scmp.lt.s32.totalorder %s23, 1
        %s297 = scalar_select %p296, %s23, 1
        %s298 = smul.addr %s297, 20
        %s299 = smul.addr %s298, 4
        %s300 = scalar_lea.vmem %s0, %s299
        %p301 = pneg %p44
        %p302 = pneg %p41
        %p303 = pneg %p65
        %p304 = pneg %p62
        %p305 = pneg %p86
        %p306 = pneg %p83
        %p307 = pneg %p107
        %p308 = pneg %p104
        %p309 = pneg %p128
        %p310 = pneg %p125
        %p311 = pneg %p149
        %p312 = pneg %p146
        %p313 = pneg %p170
        %p314 = pneg %p167
        %p315 = pneg %p191
        %p316 = pneg %p188
        %p317 = pneg %p212
        %p318 = pneg %p209
        %p319 = pneg %p238
        %p320 = pneg %p235
        %s321 = sand.u32 %s225, 1
        %s322 = scalar_lea.sflag [#allocation6], %s321
        %s323 = sand.u32 %s225, 1
        %s324 = scalar_lea.vmem [#allocation5], %s323
        %p325 = scmp.lt.s32.totalorder %s23, 1
        %s326 = scalar_select %p325, %s23, 1
        %s327 = smul.addr %s326, 20
        %s328 = smul.addr %s327, 4
        %s329 = scalar_lea.vmem %s0, %s328
        %v331 = vld [vmem:[%s329] sm:$0xf]
        %v332 = vld [vmem:[%s329 + $0x4] sm:$0xf]
        %v333 = vld [vmem:[%s329 + $0x8] sm:$0xf]
        %v334 = vld [vmem:[%s329 + $0xc] sm:$0xf]
        %v335 = vld [vmem:[%s329 + $0x10] sm:$0xf]
        %v336 = vld [vmem:[%s329 + $0x14] sm:$0xf]
        %v337 = vld [vmem:[%s329 + $0x18] sm:$0xf]
        %v338 = vld [vmem:[%s329 + $0x1c] sm:$0xf]
        %v339 = vld [vmem:[%s329 + $0x20] sm:$0xf]
        %v340 = vld [vmem:[%s329 + $0x24] sm:$0xf]
        %v341 = vld [vmem:[%s329 + $0x28] sm:$0xf]
        %v342 = vld [vmem:[%s329 + $0x2c] sm:$0xf]
        %v343 = vld [vmem:[%s329 + $0x30] sm:$0xf]
        %v344 = vld [vmem:[%s329 + $0x34] sm:$0xf]
        %v345 = vld [vmem:[%s329 + $0x38] sm:$0xf]
        %v346 = vld [vmem:[%s329 + $0x3c] sm:$0xf]
        %v347 = vld [vmem:[%s329 + $0x40] sm:$0xf]
        %v348 = vld [vmem:[%s329 + $0x44] sm:$0xf]
        %v349 = vld [vmem:[%s329 + $0x48] sm:$0xf]
        %v350 = vld [vmem:[%s329 + $0x4c] sm:$0x1]
        %v351 = vld [vmem:[%s1] sm:$0xf]
        %v352 = vld [vmem:[%s1 + $0x4] sm:$0xf]
        %v353 = vld [vmem:[%s1 + $0x8] sm:$0xf]
        %v354 = vld [vmem:[%s1 + $0xc] sm:$0xf]
        %v355 = vld [vmem:[%s1 + $0x10] sm:$0xf]
        %v356 = vld [vmem:[%s2] sm:$0x1]
        %v358 = vperm.slane %v356, 0
        %v380 = vunpack.c.l.b16 %v331
        %v381 = vunpack.c.l.b16 %v332
        %v382 = vunpack.c.l.b16 %v333
        %v383 = vunpack.c.l.b16 %v334
        %v384 = vunpack.c.l.b16 %v335
        %v385 = vunpack.c.l.b16 %v336
        %v386 = vunpack.c.l.b16 %v337
        %v387 = vunpack.c.l.b16 %v338
        %v388 = vunpack.c.l.b16 %v339
        %v389 = vunpack.c.l.b16 %v340
        %v390 = vunpack.c.l.b16 %v341
        %v391 = vunpack.c.l.b16 %v342
        %v392 = vunpack.c.l.b16 %v343
        %v393 = vunpack.c.l.b16 %v344
        %v394 = vunpack.c.l.b16 %v345
        %v395 = vunpack.c.l.b16 %v346
        %v396 = vunpack.c.l.b16 %v347
        %v397 = vunpack.c.l.b16 %v348
        %v398 = vunpack.c.l.b16 %v349
        %v399 = vunpack.c.l.b16 %v350
        %v400 = vpack.c.b16 %v381, %v380
        %v401 = vpack.c.b16 %v383, %v382
        %v402 = vpack.c.b16 %v385, %v384
        %v403 = vpack.c.b16 %v387, %v386
        %v404 = vpack.c.b16 %v389, %v388
        %v405 = vpack.c.b16 %v391, %v390
        %v406 = vpack.c.b16 %v393, %v392
        %v407 = vpack.c.b16 %v395, %v394
        %v408 = vpack.c.b16 %v397, %v396
        %v409 = vpack.c.b16 %v399, %v398
        %v415 = vunpack.c.l.b16 %v351
        %v416 = vunpack.c.l.b16 %v352
        %v417 = vunpack.c.l.b16 %v353
        %v418 = vunpack.c.l.b16 %v354
        %v419 = vunpack.c.l.b16 %v355
        %v420 = vpack.c.b16 %v416, %v415
        %v421 = vpack.c.b16 %v418, %v417
        %v422 = vpack.c.b16 %v419, %v419
        %vm425 = vcmask 326656
        %v427 = vsel %vm425, %v400, 0
        %v430 = vsel %vm425, %v401, 0
        %v433 = vsel %vm425, %v402, 0
        %v436 = vsel %vm425, %v403, 0
        %v439 = vsel %vm425, %v404, 0
        %v442 = vsel %vm425, %v405, 0
        %v445 = vsel %vm425, %v406, 0
        %v448 = vsel %vm425, %v407, 0
        %v451 = vsel %vm425, %v408, 0
        %v454 = vsel %vm425, %v409, 0
        %vm456 = vcmask 1043456
        %v458 = vsel %vm456, %v422, 0
        %460 = vmatpush.bf16.msra.mxu0 0
        %461 = vmatpush.bf16.msra.mxu0 0
        %462 = vmatpush.bf16.msra.mxu0 0
        %463 = vmatpush.bf16.msra.mxu0 0
        %464 = vmatpush.bf16.msra.mxu0 0
        %465 = vmatpush.bf16.msra.mxu0 %v458
        %466 = vmatpush.bf16.msra.mxu0 %v421
        %467 = vmatpush.bf16.msra.mxu0 %v420
        %468 = vmatmul.bf16.gmra.mxu0 %v427
        %v469 = vpop.f32.mrf.mxu0
        %v470 = vadd.f32 %v358, %v469
        %v471 = vpop.f32.mrf.mxu0
        %v472 = vadd.f32 %v358, %v471
        %473 = vmatmul.bf16.gmra.mxu0 %v430
        %v474 = vpop.f32.mrf.mxu0
        %v475 = vadd.f32 %v358, %v474
        %v476 = vpop.f32.mrf.mxu0
        %v477 = vadd.f32 %v358, %v476
        %478 = vmatmul.bf16.gmra.mxu0 %v433
        %v479 = vpop.f32.mrf.mxu0
        %v480 = vadd.f32 %v358, %v479
        %v481 = vpop.f32.mrf.mxu0
        %v482 = vadd.f32 %v358, %v481
        %483 = vmatmul.bf16.gmra.mxu0 %v436
        %v484 = vpop.f32.mrf.mxu0
        %v485 = vadd.f32 %v358, %v484
        %v486 = vpop.f32.mrf.mxu0
        %v487 = vadd.f32 %v358, %v486
        %488 = vmatmul.bf16.gmra.mxu0 %v439
        %v489 = vpop.f32.mrf.mxu0
        %v490 = vadd.f32 %v358, %v489
        %v491 = vpop.f32.mrf.mxu0
        %v492 = vadd.f32 %v358, %v491
        %493 = vmatmul.bf16.gmra.mxu0 %v442
        %v494 = vpop.f32.mrf.mxu0
        %v495 = vadd.f32 %v358, %v494
        %v496 = vpop.f32.mrf.mxu0
        %v497 = vadd.f32 %v358, %v496
        %498 = vmatmul.bf16.gmra.mxu0 %v445
        %v499 = vpop.f32.mrf.mxu0
        %v500 = vadd.f32 %v358, %v499
        %v501 = vpop.f32.mrf.mxu0
        %v502 = vadd.f32 %v358, %v501
        %503 = vmatmul.bf16.gmra.mxu0 %v448
        %v504 = vpop.f32.mrf.mxu0
        %v505 = vadd.f32 %v358, %v504
        %v506 = vpop.f32.mrf.mxu0
        %v507 = vadd.f32 %v358, %v506
        %508 = vmatmul.bf16.gmra.mxu0 %v451
        %v509 = vpop.f32.mrf.mxu0
        %v510 = vadd.f32 %v358, %v509
        %v511 = vpop.f32.mrf.mxu0
        %v512 = vadd.f32 %v358, %v511
        %513 = vmatmul.bf16.gmra.mxu0 %v454
        %v514 = vpop.f32.mrf.mxu0
        %v515 = vadd.f32 %v358, %v514
        %v516 = vpop.f32.mrf.mxu0
        %v517 = vadd.f32 %v358, %v516
        %518 = vdwg.mxu0
        %v519 = vmax.f32 %v470, 0.0
        %v520 = vmax.f32 %v472, 0.0
        %v521 = vmax.f32 %v475, 0.0
        %v522 = vmax.f32 %v477, 0.0
        %v523 = vmax.f32 %v480, 0.0
        %v524 = vmax.f32 %v482, 0.0
        %v525 = vmax.f32 %v485, 0.0
        %v526 = vmax.f32 %v487, 0.0
        %v527 = vmax.f32 %v490, 0.0
        %v528 = vmax.f32 %v492, 0.0
        %v529 = vmax.f32 %v495, 0.0
        %v530 = vmax.f32 %v497, 0.0
        %v531 = vmax.f32 %v500, 0.0
        %v532 = vmax.f32 %v502, 0.0
        %v533 = vmax.f32 %v505, 0.0
        %v534 = vmax.f32 %v507, 0.0
        %v535 = vmax.f32 %v510, 0.0
        %v536 = vmax.f32 %v512, 0.0
        %v537 = vmax.f32 %v515, 0.0
        %v538 = vmax.f32 %v517, 0.0
        %vm558 = vcmask 1046528
        %v559 = vrot.slane %v519, 1
        %v560 = vrot.slane %v520, 1
        %v561 = vsel %vm558, %v559, %v560
        %v562 = vrot.slane %v521, 1
        %v563 = vsel %vm558, %v560, %v562
        %v564 = vrot.slane %v522, 1
        %v565 = vsel %vm558, %v562, %v564
        %v566 = vrot.slane %v523, 1
        %v567 = vsel %vm558, %v564, %v566
        %v568 = vrot.slane %v524, 1
        %v569 = vsel %vm558, %v566, %v568
        %v570 = vrot.slane %v525, 1
        %v571 = vsel %vm558, %v568, %v570
        %v572 = vrot.slane %v526, 1
        %v573 = vsel %vm558, %v570, %v572
        %v574 = vrot.slane %v527, 1
        %v575 = vsel %vm558, %v572, %v574
        %v576 = vrot.slane %v528, 1
        %v577 = vsel %vm558, %v574, %v576
        %v578 = vrot.slane %v529, 1
        %v579 = vsel %vm558, %v576, %v578
        %v580 = vrot.slane %v530, 1
        %v581 = vsel %vm558, %v578, %v580
        %v582 = vrot.slane %v531, 1
        %v583 = vsel %vm558, %v580, %v582
        %v584 = vrot.slane %v532, 1
        %v585 = vsel %vm558, %v582, %v584
        %v586 = vrot.slane %v533, 1
        %v587 = vsel %vm558, %v584, %v586
        %v588 = vrot.slane %v534, 1
        %v589 = vsel %vm558, %v586, %v588
        %v590 = vrot.slane %v535, 1
        %v591 = vsel %vm558, %v588, %v590
        %v592 = vrot.slane %v536, 1
        %v593 = vsel %vm558, %v590, %v592
        %v594 = vrot.slane %v537, 1
        %v595 = vsel %vm558, %v592, %v594
        %v615 = vmax.f32 %v519, %v561
        %v616 = vmax.f32 %v520, %v563
        %v617 = vmax.f32 %v521, %v565
        %v618 = vmax.f32 %v522, %v567
        %v619 = vmax.f32 %v523, %v569
        %v620 = vmax.f32 %v524, %v571
        %v621 = vmax.f32 %v525, %v573
        %v622 = vmax.f32 %v526, %v575
        %v623 = vmax.f32 %v527, %v577
        %v624 = vmax.f32 %v528, %v579
        %v625 = vmax.f32 %v529, %v581
        %v626 = vmax.f32 %v530, %v583
        %v627 = vmax.f32 %v531, %v585
        %v628 = vmax.f32 %v532, %v587
        %v629 = vmax.f32 %v533, %v589
        %v630 = vmax.f32 %v534, %v591
        %v631 = vmax.f32 %v535, %v593
        %v632 = vmax.f32 %v536, %v595
        %v633 = vmax.f32 %v537, %v594
        %vm635 = vcmask 1045504
        %v636 = vrot.slane %v519, 2
        %v637 = vrot.slane %v520, 2
        %v638 = vsel %vm635, %v636, %v637
        %v639 = vrot.slane %v521, 2
        %v640 = vsel %vm635, %v637, %v639
        %v641 = vrot.slane %v522, 2
        %v642 = vsel %vm635, %v639, %v641
        %v643 = vrot.slane %v523, 2
        %v644 = vsel %vm635, %v641, %v643
        %v645 = vrot.slane %v524, 2
        %v646 = vsel %vm635, %v643, %v645
        %v647 = vrot.slane %v525, 2
        %v648 = vsel %vm635, %v645, %v647
        %v649 = vrot.slane %v526, 2
        %v650 = vsel %vm635, %v647, %v649
        %v651 = vrot.slane %v527, 2
        %v652 = vsel %vm635, %v649, %v651
        %v653 = vrot.slane %v528, 2
        %v654 = vsel %vm635, %v651, %v653
        %v655 = vrot.slane %v529, 2
        %v656 = vsel %vm635, %v653, %v655
        %v657 = vrot.slane %v530, 2
        %v658 = vsel %vm635, %v655, %v657
        %v659 = vrot.slane %v531, 2
        %v660 = vsel %vm635, %v657, %v659
        %v661 = vrot.slane %v532, 2
        %v662 = vsel %vm635, %v659, %v661
        %v663 = vrot.slane %v533, 2
        %v664 = vsel %vm635, %v661, %v663
        %v665 = vrot.slane %v534, 2
        %v666 = vsel %vm635, %v663, %v665
        %v667 = vrot.slane %v535, 2
        %v668 = vsel %vm635, %v665, %v667
        %v669 = vrot.slane %v536, 2
        %v670 = vsel %vm635, %v667, %v669
        %v671 = vrot.slane %v537, 2
        %v672 = vsel %vm635, %v669, %v671
        %v673 = vrot.slane %v538, 2
        %v674 = vsel %vm635, %v671, %v673
        %v694 = vmax.f32 %v615, %v638
        %v695 = vmax.f32 %v616, %v640
        %v696 = vmax.f32 %v617, %v642
        %v697 = vmax.f32 %v618, %v644
        %v698 = vmax.f32 %v619, %v646
        %v699 = vmax.f32 %v620, %v648
        %v700 = vmax.f32 %v621, %v650
        %v701 = vmax.f32 %v622, %v652
        %v702 = vmax.f32 %v623, %v654
        %v703 = vmax.f32 %v624, %v656
        %v704 = vmax.f32 %v625, %v658
        %v705 = vmax.f32 %v626, %v660
        %v706 = vmax.f32 %v627, %v662
        %v707 = vmax.f32 %v628, %v664
        %v708 = vmax.f32 %v629, %v666
        %v709 = vmax.f32 %v630, %v668
        %v710 = vmax.f32 %v631, %v670
        %v711 = vmax.f32 %v632, %v672
        %v712 = vmax.f32 %v633, %v674
        %713 = vst [vmem:[#allocation2] sm:$0xff] %v694
        %714 = vst [vmem:[#allocation2 + $0x8] sm:$0xff] %v695
        %715 = vst [vmem:[#allocation2 + $0x10] sm:$0xff] %v696
        %716 = vst [vmem:[#allocation2 + $0x18] sm:$0xff] %v697
        %717 = vst [vmem:[#allocation2 + $0x20] sm:$0xff] %v698
        %718 = vst [vmem:[#allocation2 + $0x28] sm:$0xff] %v699
        %719 = vst [vmem:[#allocation2 + $0x30] sm:$0xff] %v700
        %720 = vst [vmem:[#allocation2 + $0x38] sm:$0xff] %v701
        %721 = vst [vmem:[#allocation2 + $0x40] sm:$0xff] %v702
        %722 = vst [vmem:[#allocation2 + $0x48] sm:$0xff] %v703
        %723 = vst [vmem:[#allocation2 + $0x50] sm:$0xff] %v704
        %724 = vst [vmem:[#allocation2 + $0x58] sm:$0xff] %v705
        %725 = vst [vmem:[#allocation2 + $0x60] sm:$0xff] %v706
        %726 = vst [vmem:[#allocation2 + $0x68] sm:$0xff] %v707
        %727 = vst [vmem:[#allocation2 + $0x70] sm:$0xff] %v708
        %728 = vst [vmem:[#allocation2 + $0x78] sm:$0xff] %v709
        %729 = vst [vmem:[#allocation2 + $0x80] sm:$0xff] %v710
        %730 = vst [vmem:[#allocation2 + $0x88] sm:$0xff] %v711
        %731 = vst [vmem:[#allocation2 + $0x90] sm:$0x7f] %v712
        %v732 = vld [vmem:[#allocation2] ss:$3 sm:$0xff]
        %s733 = scalar_lea.vmem [#allocation2], 24
        %v734 = vld [vmem:[%s733] ss:$3 sm:$0xff]
        %s735 = scalar_lea.vmem [#allocation2], 48
        %v736 = vld [vmem:[%s735] ss:$3 sm:$0xff]
        %s737 = scalar_lea.vmem [#allocation2], 72
        %v738 = vld [vmem:[%s737] ss:$3 sm:$0xff]
        %s739 = scalar_lea.vmem [#allocation2], 96
        %v740 = vld [vmem:[%s739] ss:$3 sm:$0xff]
        %s741 = scalar_lea.vmem [#allocation2], 120
        %v742 = vld [vmem:[%s741] ss:$3 sm:$0x7f]
        %v743 = vpack.c.bf16 %v732, %v732
        %v744 = vpack.c.bf16 %v734, %v734
        %v745 = vpack.c.bf16 %v736, %v736
        %v746 = vpack.c.bf16 %v738, %v738
        %v747 = vpack.c.bf16 %v740, %v740
        %v748 = vpack.c.bf16 %v742, %v742
        %749 = vst [vmem:[#allocation3] sm:$0xf] %v743
        %750 = vst [vmem:[#allocation3 + $0x14] sm:$0xf] %v744
        %751 = vst [vmem:[#allocation3 + $0x28] sm:$0xf] %v745
        %752 = vst [vmem:[#allocation3 + $0x3c] sm:$0xf] %v746
        %753 = vst [vmem:[#allocation3 + $0x50] sm:$0xf] %v747
        %vm754 = vcmask 1043456
        %vm755 = vsmask.f32 3328
        %vm756 = vmand %vm754, %vm755
        %v757 = vld [vmem:[#allocation3 + $0x64] sm:$0xf]
        %v758 = vsel %vm756, %v748, %v757
        %759 = vst [vmem:[#allocation3 + $0x64] sm:$0xf] %v758
        %s760 = scalar_lea.vmem [#allocation2], 3
        %v761 = vld [vmem:[%s760] ss:$3 sm:$0xff]
        %s762 = scalar_lea.vmem [#allocation2], 27
        %v763 = vld [vmem:[%s762] ss:$3 sm:$0xff]
        %s764 = scalar_lea.vmem [#allocation2], 51
        %v765 = vld [vmem:[%s764] ss:$3 sm:$0xff]
        %s766 = scalar_lea.vmem [#allocation2], 75
        %v767 = vld [vmem:[%s766] ss:$3 sm:$0xff]
        %s768 = scalar_lea.vmem [#allocation2], 99
        %v769 = vld [vmem:[%s768] ss:$3 sm:$0xff]
        %s770 = scalar_lea.vmem [#allocation2], 123
        %v771 = vld [vmem:[%s770] ss:$3 sm:$0x7f]
        %v772 = vpack.c.bf16 %v761, %v761
        %v773 = vpack.c.bf16 %v763, %v763
        %v774 = vpack.c.bf16 %v765, %v765
        %v775 = vpack.c.bf16 %v767, %v767
        %v776 = vpack.c.bf16 %v769, %v769
        %v777 = vpack.c.bf16 %v771, %v771
        %778 = vst [vmem:[#allocation3 + $0x4] sm:$0xf] %v772
        %779 = vst [vmem:[#allocation3 + $0x18] sm:$0xf] %v773
        %780 = vst [vmem:[#allocation3 + $0x2c] sm:$0xf] %v774
        %781 = vst [vmem:[#allocation3 + $0x40] sm:$0xf] %v775
        %782 = vst [vmem:[#allocation3 + $0x54] sm:$0xf] %v776
        %v783 = vld [vmem:[#allocation3 + $0x68] sm:$0xf]
        %v784 = vsel %vm756, %v777, %v783
        %785 = vst [vmem:[#allocation3 + $0x68] sm:$0xf] %v784
        %s786 = scalar_lea.vmem [#allocation2], 6
        %v787 = vld [vmem:[%s786] ss:$3 sm:$0xff]
        %s788 = scalar_lea.vmem [#allocation2], 30
        %v789 = vld [vmem:[%s788] ss:$3 sm:$0xff]
        %s790 = scalar_lea.vmem [#allocation2], 54
        %v791 = vld [vmem:[%s790] ss:$3 sm:$0xff]
        %s792 = scalar_lea.vmem [#allocation2], 78
        %v793 = vld [vmem:[%s792] ss:$3 sm:$0xff]
        %s794 = scalar_lea.vmem [#allocation2], 102
        %v795 = vld [vmem:[%s794] ss:$3 sm:$0xff]
        %s796 = scalar_lea.vmem [#allocation2], 126
        %v797 = vld [vmem:[%s796] ss:$3 sm:$0x7f]
        %v798 = vpack.c.bf16 %v787, %v787
        %v799 = vpack.c.bf16 %v789, %v789
        %v800 = vpack.c.bf16 %v791, %v791
        %v801 = vpack.c.bf16 %v793, %v793
        %v802 = vpack.c.bf16 %v795, %v795
        %v803 = vpack.c.bf16 %v797, %v797
        %804 = vst [vmem:[#allocation3 + $0x8] sm:$0xf] %v798
        %805 = vst [vmem:[#allocation3 + $0x1c] sm:$0xf] %v799
        %806 = vst [vmem:[#allocation3 + $0x30] sm:$0xf] %v800
        %807 = vst [vmem:[#allocation3 + $0x44] sm:$0xf] %v801
        %808 = vst [vmem:[#allocation3 + $0x58] sm:$0xf] %v802
        %v809 = vld [vmem:[#allocation3 + $0x6c] sm:$0xf]
        %v810 = vsel %vm756, %v803, %v809
        %811 = vst [vmem:[#allocation3 + $0x6c] sm:$0xf] %v810
        %s812 = scalar_lea.vmem [#allocation2], 9
        %v813 = vld [vmem:[%s812] ss:$3 sm:$0xff]
        %s814 = scalar_lea.vmem [#allocation2], 33
        %v815 = vld [vmem:[%s814] ss:$3 sm:$0xff]
        %s816 = scalar_lea.vmem [#allocation2], 57
        %v817 = vld [vmem:[%s816] ss:$3 sm:$0xff]
        %s818 = scalar_lea.vmem [#allocation2], 81
        %v819 = vld [vmem:[%s818] ss:$3 sm:$0xff]
        %s820 = scalar_lea.vmem [#allocation2], 105
        %v821 = vld [vmem:[%s820] ss:$3 sm:$0xff]
        %s822 = scalar_lea.vmem [#allocation2], 129
        %v823 = vld [vmem:[%s822] ss:$3 sm:$0x7f]
        %v824 = vpack.c.bf16 %v813, %v813
        %v825 = vpack.c.bf16 %v815, %v815
        %v826 = vpack.c.bf16 %v817, %v817
        %v827 = vpack.c.bf16 %v819, %v819
        %v828 = vpack.c.bf16 %v821, %v821
        %v829 = vpack.c.bf16 %v823, %v823
        %830 = vst [vmem:[#allocation3 + $0xc] sm:$0xf] %v824
        %831 = vst [vmem:[#allocation3 + $0x20] sm:$0xf] %v825
        %832 = vst [vmem:[#allocation3 + $0x34] sm:$0xf] %v826
        %833 = vst [vmem:[#allocation3 + $0x48] sm:$0xf] %v827
        %834 = vst [vmem:[#allocation3 + $0x5c] sm:$0xf] %v828
        %v835 = vld [vmem:[#allocation3 + $0x70] sm:$0xf]
        %v836 = vsel %vm756, %v829, %v835
        %837 = vst [vmem:[#allocation3 + $0x70] sm:$0xf] %v836
        %s838 = scalar_lea.vmem [#allocation2], 12
        %v839 = vld [vmem:[%s838] ss:$3 sm:$0xff]
        %s840 = scalar_lea.vmem [#allocation2], 36
        %v841 = vld [vmem:[%s840] ss:$3 sm:$0xff]
        %s842 = scalar_lea.vmem [#allocation2], 60
        %v843 = vld [vmem:[%s842] ss:$3 sm:$0xff]
        %s844 = scalar_lea.vmem [#allocation2], 84
        %v845 = vld [vmem:[%s844] ss:$3 sm:$0xff]
        %s846 = scalar_lea.vmem [#allocation2], 108
        %v847 = vld [vmem:[%s846] ss:$3 sm:$0xff]
        %s848 = scalar_lea.vmem [#allocation2], 132
        %v849 = vld [vmem:[%s848] ss:$3 sm:$0x7f]
        %v850 = vpack.c.bf16 %v839, %v839
        %v851 = vpack.c.bf16 %v841, %v841
        %v852 = vpack.c.bf16 %v843, %v843
        %v853 = vpack.c.bf16 %v845, %v845
        %v854 = vpack.c.bf16 %v847, %v847
        %v855 = vpack.c.bf16 %v849, %v849
        %856 = vst [vmem:[#allocation3 + $0x10] sm:$0xf] %v850
        %857 = vst [vmem:[#allocation3 + $0x24] sm:$0xf] %v851
        %858 = vst [vmem:[#allocation3 + $0x38] sm:$0xf] %v852
        %859 = vst [vmem:[#allocation3 + $0x4c] sm:$0xf] %v853
        %860 = vst [vmem:[#allocation3 + $0x60] sm:$0xf] %v854
        %v861 = vld [vmem:[#allocation3 + $0x74] sm:$0xf]
        %v862 = vsel %vm756, %v855, %v861
        %863 = vst [vmem:[#allocation3 + $0x74] sm:$0xf] %v862
        %v864 = vld [vmem:[#allocation3] sm:$0xff]
        %v865 = vld [vmem:[#allocation3 + $0x8] sm:$0xff]
        %v866 = vld [vmem:[#allocation3 + $0x10] sm:$0xf]
        %v867 = vld [vmem:[#allocation3 + $0x14] sm:$0xff]
        %v868 = vld [vmem:[#allocation3 + $0x1c] sm:$0xff]
        %v869 = vld [vmem:[#allocation3 + $0x24] sm:$0xf]
        %v870 = vld [vmem:[#allocation3 + $0x28] sm:$0xff]
        %v871 = vld [vmem:[#allocation3 + $0x30] sm:$0xff]
        %v872 = vld [vmem:[#allocation3 + $0x38] sm:$0xf]
        %v873 = vld [vmem:[#allocation3 + $0x3c] sm:$0xff]
        %v874 = vld [vmem:[#allocation3 + $0x44] sm:$0xff]
        %v875 = vld [vmem:[#allocation3 + $0x4c] sm:$0xf]
        %v876 = vld [vmem:[#allocation3 + $0x50] sm:$0xff]
        %v877 = vld [vmem:[#allocation3 + $0x58] sm:$0xff]
        %v878 = vld [vmem:[#allocation3 + $0x60] sm:$0xf]
        %v879 = vld [vmem:[#allocation3 + $0x64] sm:$0xff]
        %v880 = vld [vmem:[#allocation3 + $0x6c] sm:$0xff]
        %v881 = vld [vmem:[#allocation3 + $0x74] sm:$0xf]
        %v882 = vld [vmem:[%s3] sm:$0xf]
        %v883 = vld [vmem:[%s3 + $0x4] sm:$0xf]
        %v884 = vld [vmem:[%s3 + $0x8] sm:$0xf]
        %v885 = vld [vmem:[%s3 + $0xc] sm:$0xf]
        %v886 = vld [vmem:[%s3 + $0x10] sm:$0xf]
        %v887 = vld [vmem:[%s3 + $0x14] sm:$0xf]
        %v888 = vld [vmem:[%s3 + $0x18] sm:$0xf]
        %v889 = vld [vmem:[%s3 + $0x1c] sm:$0xf]
        %v890 = vld [vmem:[%s3 + $0x20] sm:$0xf]
        %v891 = vld [vmem:[%s3 + $0x24] sm:$0xf]
        %v892 = vld [vmem:[%s3 + $0x28] sm:$0xf]
        %v893 = vld [vmem:[%s3 + $0x2c] sm:$0xf]
        %v894 = vld [vmem:[%s3 + $0x30] sm:$0xf]
        %v895 = vld [vmem:[%s3 + $0x34] sm:$0xf]
        %v896 = vld [vmem:[%s3 + $0x38] sm:$0xf]
        %v897 = vld [vmem:[%s3 + $0x3c] sm:$0xf]
        %v898 = vld [vmem:[%s3 + $0x40] sm:$0xf]
        %v899 = vld [vmem:[%s3 + $0x44] sm:$0xf]
        %v900 = vld [vmem:[%s3 + $0x48] sm:$0xf]
        %v901 = vld [vmem:[%s3 + $0x4c] sm:$0xf]
        %v902 = vld [vmem:[%s3 + $0x50] sm:$0xf]
        %v903 = vld [vmem:[%s3 + $0x54] sm:$0xf]
        %v904 = vld [vmem:[%s3 + $0x58] sm:$0xf]
        %v905 = vld [vmem:[%s3 + $0x5c] sm:$0xf]
        %v906 = vld [vmem:[%s3 + $0x60] sm:$0xf]
        %v907 = vld [vmem:[%s3 + $0x64] sm:$0xf]
        %v908 = vld [vmem:[%s3 + $0x68] sm:$0xf]
        %v909 = vld [vmem:[%s3 + $0x6c] sm:$0xf]
        %v910 = vld [vmem:[%s3 + $0x70] sm:$0xf]
        %v911 = vld [vmem:[%s3 + $0x74] sm:$0xf]
        %v912 = vld [vmem:[%s3 + $0x78] sm:$0xf]
        %v913 = vld [vmem:[%s3 + $0x7c] sm:$0xf]
        %v914 = vld [vmem:[%s3 + $0x80] sm:$0xf]
        %v915 = vld [vmem:[%s3 + $0x84] sm:$0xf]
        %v916 = vld [vmem:[%s3 + $0x88] sm:$0xf]
        %v917 = vld [vmem:[%s3 + $0x8c] sm:$0xf]
        %v918 = vld [vmem:[%s3 + $0x90] sm:$0xf]
        %v919 = vld [vmem:[%s3 + $0x94] sm:$0xf]
        %v920 = vld [vmem:[%s3 + $0x98] sm:$0xf]
        %v921 = vld [vmem:[%s3 + $0x9c] sm:$0xf]
        %v922 = vld [vmem:[%s3 + $0xa0] sm:$0xf]
        %v923 = vld [vmem:[%s3 + $0xa4] sm:$0xf]
        %v924 = vld [vmem:[%s3 + $0xa8] sm:$0xf]
        %v925 = vld [vmem:[%s3 + $0xac] sm:$0xf]
        %v926 = vld [vmem:[%s3 + $0xb0] sm:$0xf]
        %v927 = vld [vmem:[%s3 + $0xb4] sm:$0xf]
        %v928 = vld [vmem:[%s3 + $0xb8] sm:$0xf]
        %v929 = vld [vmem:[%s3 + $0xbc] sm:$0xf]
        %v930 = vld [vmem:[%s3 + $0xc0] sm:$0xf]
        %v931 = vld [vmem:[%s3 + $0xc4] sm:$0xf]
        %v932 = vld [vmem:[%s3 + $0xc8] sm:$0xf]
        %v933 = vld [vmem:[%s3 + $0xcc] sm:$0xf]
        %v934 = vld [vmem:[%s3 + $0xd0] sm:$0xf]
        %v935 = vld [vmem:[%s3 + $0xd4] sm:$0xf]
        %v936 = vld [vmem:[%s3 + $0xd8] sm:$0xf]
        %v937 = vld [vmem:[%s3 + $0xdc] sm:$0xf]
        %v938 = vld [vmem:[%s3 + $0xe0] sm:$0xf]
        %v939 = vld [vmem:[%s3 + $0xe4] sm:$0xf]
        %v940 = vld [vmem:[%s3 + $0xe8] sm:$0xf]
        %v941 = vld [vmem:[%s3 + $0xec] sm:$0xf]
        %v942 = vld [vmem:[%s3 + $0xf0] sm:$0xf]
        %v943 = vld [vmem:[%s3 + $0xf4] sm:$0xf]
        %v944 = vld [vmem:[%s3 + $0xf8] sm:$0xf]
        %v945 = vld [vmem:[%s3 + $0xfc] sm:$0xf]
        %v946 = vld [vmem:[%s3 + $0x100] sm:$0xf]
        %v947 = vld [vmem:[%s3 + $0x104] sm:$0xf]
        %v948 = vld [vmem:[%s3 + $0x108] sm:$0xf]
        %v949 = vld [vmem:[%s3 + $0x10c] sm:$0xf]
        %v950 = vld [vmem:[%s3 + $0x110] sm:$0xf]
        %v951 = vld [vmem:[%s3 + $0x114] sm:$0xf]
        %v952 = vld [vmem:[%s3 + $0x118] sm:$0xf]
        %v953 = vld [vmem:[%s3 + $0x11c] sm:$0xf]
        %v954 = vld [vmem:[%s3 + $0x120] sm:$0xf]
        %v955 = vld [vmem:[%s3 + $0x124] sm:$0xf]
        %v956 = vld [vmem:[%s3 + $0x128] sm:$0xf]
        %v957 = vld [vmem:[%s3 + $0x12c] sm:$0xf]
        %v958 = vld [vmem:[%s3 + $0x130] sm:$0xf]
        %v959 = vld [vmem:[%s3 + $0x134] sm:$0xf]
        %v960 = vld [vmem:[%s3 + $0x138] sm:$0xf]
        %v961 = vld [vmem:[%s3 + $0x13c] sm:$0xf]
        %v962 = vld [vmem:[%s4] sm:$0x1]
        %v964 = vperm.slane %v962, 0
        %v984 = vunpack.c.l.b16 %v864
        %v985 = vunpack.c.h.b16 %v864
        %v986 = vunpack.c.l.b16 %v865
        %v987 = vunpack.c.h.b16 %v865
        %v988 = vunpack.c.l.b16 %v866
        %v989 = vunpack.c.l.b16 %v867
        %v990 = vunpack.c.h.b16 %v867
        %v991 = vunpack.c.l.b16 %v868
        %v992 = vunpack.c.h.b16 %v868
        %v993 = vunpack.c.l.b16 %v869
        %v994 = vunpack.c.l.b16 %v870
        %v995 = vunpack.c.h.b16 %v870
        %v996 = vunpack.c.l.b16 %v871
        %v997 = vunpack.c.h.b16 %v871
        %v998 = vunpack.c.l.b16 %v872
        %v999 = vunpack.c.l.b16 %v873
        %v1000 = vunpack.c.h.b16 %v873
        %v1001 = vunpack.c.l.b16 %v874
        %v1002 = vunpack.c.h.b16 %v874
        %v1003 = vunpack.c.l.b16 %v875
        %v1004 = vunpack.c.l.b16 %v876
        %v1005 = vunpack.c.h.b16 %v876
        %v1006 = vunpack.c.l.b16 %v877
        %v1007 = vunpack.c.h.b16 %v877
        %v1008 = vunpack.c.l.b16 %v878
        %v1009 = vunpack.c.l.b16 %v879
        %v1010 = vunpack.c.h.b16 %v879
        %v1011 = vunpack.c.l.b16 %v880
        %v1012 = vunpack.c.h.b16 %v880
        %v1013 = vunpack.c.l.b16 %v881
        %v1014 = vpack.c.b16 %v989, %v984
        %v1015 = vpack.c.b16 %v990, %v985
        %v1016 = vpack.c.b16 %v991, %v986
        %v1017 = vpack.c.b16 %v992, %v987
        %v1018 = vpack.c.b16 %v993, %v988
        %v1019 = vpack.c.b16 %v999, %v994
        %v1020 = vpack.c.b16 %v1000, %v995
        %v1021 = vpack.c.b16 %v1001, %v996
        %v1022 = vpack.c.b16 %v1002, %v997
        %v1023 = vpack.c.b16 %v1003, %v998
        %v1024 = vpack.c.b16 %v1009, %v1004
        %v1025 = vpack.c.b16 %v1010, %v1005
        %v1026 = vpack.c.b16 %v1011, %v1006
        %v1027 = vpack.c.b16 %v1012, %v1007
        %v1028 = vpack.c.b16 %v1013, %v1008
        %v1124 = vunpack.c.l.b16 %v882
        %v1125 = vunpack.c.l.b16 %v883
        %v1126 = vunpack.c.l.b16 %v884
        %v1127 = vunpack.c.l.b16 %v885
        %v1128 = vunpack.c.l.b16 %v886
        %v1129 = vunpack.c.l.b16 %v887
        %v1130 = vunpack.c.l.b16 %v888
        %v1131 = vunpack.c.l.b16 %v889
        %v1132 = vunpack.c.l.b16 %v890
        %v1133 = vunpack.c.l.b16 %v891
        %v1134 = vunpack.c.l.b16 %v892
        %v1135 = vunpack.c.l.b16 %v893
        %v1136 = vunpack.c.l.b16 %v894
        %v1137 = vunpack.c.l.b16 %v895
        %v1138 = vunpack.c.l.b16 %v896
        %v1139 = vunpack.c.l.b16 %v897
        %v1140 = vunpack.c.l.b16 %v898
        %v1141 = vunpack.c.l.b16 %v899
        %v1142 = vunpack.c.l.b16 %v900
        %v1143 = vunpack.c.l.b16 %v901
        %v1144 = vunpack.c.l.b16 %v902
        %v1145 = vunpack.c.l.b16 %v903
        %v1146 = vunpack.c.l.b16 %v904
        %v1147 = vunpack.c.l.b16 %v905
        %v1148 = vunpack.c.l.b16 %v906
        %v1149 = vunpack.c.l.b16 %v907
        %v1150 = vunpack.c.l.b16 %v908
        %v1151 = vunpack.c.l.b16 %v909
        %v1152 = vunpack.c.l.b16 %v910
        %v1153 = vunpack.c.l.b16 %v911
        %v1154 = vunpack.c.l.b16 %v912
        %v1155 = vunpack.c.l.b16 %v913
        %v1156 = vunpack.c.l.b16 %v914
        %v1157 = vunpack.c.l.b16 %v915
        %v1158 = vunpack.c.l.b16 %v916
        %v1159 = vunpack.c.l.b16 %v917
        %v1160 = vunpack.c.l.b16 %v918
        %v1161 = vunpack.c.l.b16 %v919
        %v1162 = vunpack.c.l.b16 %v920
        %v1163 = vunpack.c.l.b16 %v921
        %v1164 = vunpack.c.l.b16 %v922
        %v1165 = vunpack.c.l.b16 %v923
        %v1166 = vunpack.c.l.b16 %v924
        %v1167 = vunpack.c.l.b16 %v925
        %v1168 = vunpack.c.l.b16 %v926
        %v1169 = vunpack.c.l.b16 %v927
        %v1170 = vunpack.c.l.b16 %v928
        %v1171 = vunpack.c.l.b16 %v929
        %v1172 = vunpack.c.l.b16 %v930
        %v1173 = vunpack.c.l.b16 %v931
        %v1174 = vunpack.c.l.b16 %v932
        %v1175 = vunpack.c.l.b16 %v933
        %v1176 = vunpack.c.l.b16 %v934
        %v1177 = vunpack.c.l.b16 %v935
        %v1178 = vunpack.c.l.b16 %v936
        %v1179 = vunpack.c.l.b16 %v937
        %v1180 = vunpack.c.l.b16 %v938
        %v1181 = vunpack.c.l.b16 %v939
        %v1182 = vunpack.c.l.b16 %v940
        %v1183 = vunpack.c.l.b16 %v941
        %v1184 = vunpack.c.l.b16 %v942
        %v1185 = vunpack.c.l.b16 %v943
        %v1186 = vunpack.c.l.b16 %v944
        %v1187 = vunpack.c.l.b16 %v945
        %v1188 = vunpack.c.l.b16 %v946
        %v1189 = vunpack.c.l.b16 %v947
        %v1190 = vunpack.c.l.b16 %v948
        %v1191 = vunpack.c.l.b16 %v949
        %v1192 = vunpack.c.l.b16 %v950
        %v1193 = vunpack.c.l.b16 %v951
        %v1194 = vunpack.c.l.b16 %v952
        %v1195 = vunpack.c.l.b16 %v953
        %v1196 = vunpack.c.l.b16 %v954
        %v1197 = vunpack.c.l.b16 %v955
        %v1198 = vunpack.c.l.b16 %v956
        %v1199 = vunpack.c.l.b16 %v957
        %v1200 = vunpack.c.l.b16 %v958
        %v1201 = vunpack.c.l.b16 %v959
        %v1202 = vunpack.c.l.b16 %v960
        %v1203 = vunpack.c.l.b16 %v961
        %v1204 = vpack.c.b16 %v1125, %v1124
        %v1205 = vpack.c.b16 %v1127, %v1126
        %v1206 = vpack.c.b16 %v1129, %v1128
        %v1207 = vpack.c.b16 %v1131, %v1130
        %v1208 = vpack.c.b16 %v1133, %v1132
        %v1209 = vpack.c.b16 %v1135, %v1134
        %v1210 = vpack.c.b16 %v1137, %v1136
        %v1211 = vpack.c.b16 %v1139, %v1138
        %v1212 = vpack.c.b16 %v1141, %v1140
        %v1213 = vpack.c.b16 %v1143, %v1142
        %v1214 = vpack.c.b16 %v1145, %v1144
        %v1215 = vpack.c.b16 %v1147, %v1146
        %v1216 = vpack.c.b16 %v1149, %v1148
        %v1217 = vpack.c.b16 %v1151, %v1150
        %v1218 = vpack.c.b16 %v1153, %v1152
        %v1219 = vpack.c.b16 %v1155, %v1154
        %v1220 = vpack.c.b16 %v1157, %v1156
        %v1221 = vpack.c.b16 %v1159, %v1158
        %v1222 = vpack.c.b16 %v1161, %v1160
        %v1223 = vpack.c.b16 %v1163, %v1162
        %v1224 = vpack.c.b16 %v1165, %v1164
        %v1225 = vpack.c.b16 %v1167, %v1166
        %v1226 = vpack.c.b16 %v1169, %v1168
        %v1227 = vpack.c.b16 %v1171, %v1170
        %v1228 = vpack.c.b16 %v1173, %v1172
        %v1229 = vpack.c.b16 %v1175, %v1174
        %v1230 = vpack.c.b16 %v1177, %v1176
        %v1231 = vpack.c.b16 %v1179, %v1178
        %v1232 = vpack.c.b16 %v1181, %v1180
        %v1233 = vpack.c.b16 %v1183, %v1182
        %v1234 = vpack.c.b16 %v1185, %v1184
        %v1235 = vpack.c.b16 %v1187, %v1186
        %v1236 = vpack.c.b16 %v1189, %v1188
        %v1237 = vpack.c.b16 %v1191, %v1190
        %v1238 = vpack.c.b16 %v1193, %v1192
        %v1239 = vpack.c.b16 %v1195, %v1194
        %v1240 = vpack.c.b16 %v1197, %v1196
        %v1241 = vpack.c.b16 %v1199, %v1198
        %v1242 = vpack.c.b16 %v1201, %v1200
        %v1243 = vpack.c.b16 %v1203, %v1202
        %1284 = vmatpush.bf16.msra.mxu0 %v1211
        %1285 = vmatpush.bf16.msra.mxu0 %v1210
        %1286 = vmatpush.bf16.msra.mxu0 %v1209
        %1287 = vmatpush.bf16.msra.mxu0 %v1208
        %1288 = vmatpush.bf16.msra.mxu0 %v1207
        %1289 = vmatpush.bf16.msra.mxu0 %v1206
        %1290 = vmatpush.bf16.msra.mxu0 %v1205
        %1291 = vmatpush.bf16.msra.mxu0 %v1204
        %1292 = vmatmul.bf16.gmra.mxu0 %v1014
        %v1293 = vpop.f32.mrf.mxu0
        %v1294 = vadd.f32 %v964, %v1293
        %v1295 = vpop.f32.mrf.mxu0
        %v1296 = vadd.f32 %v964, %v1295
        %1297 = vmatmul.bf16.gmra.mxu0 %v1019
        %v1298 = vpop.f32.mrf.mxu0
        %v1299 = vadd.f32 %v964, %v1298
        %v1300 = vpop.f32.mrf.mxu0
        %v1301 = vadd.f32 %v964, %v1300
        %1302 = vmatmul.bf16.gmra.mxu0 %v1024
        %v1303 = vpop.f32.mrf.mxu0
        %v1304 = vadd.f32 %v964, %v1303
        %v1305 = vpop.f32.mrf.mxu0
        %v1306 = vadd.f32 %v964, %v1305
        %1307 = vdwg.mxu0
        %1308 = vmatpush.bf16.msra.mxu0 %v1219
        %1309 = vmatpush.bf16.msra.mxu0 %v1218
        %1310 = vmatpush.bf16.msra.mxu0 %v1217
        %1311 = vmatpush.bf16.msra.mxu0 %v1216
        %1312 = vmatpush.bf16.msra.mxu0 %v1215
        %1313 = vmatpush.bf16.msra.mxu0 %v1214
        %1314 = vmatpush.bf16.msra.mxu0 %v1213
        %1315 = vmatpush.bf16.msra.mxu0 %v1212
        %1316 = vmatmul.bf16.gmra.mxu0 %v1015
        %v1317 = vpop.f32.mrf.mxu0
        %v1318 = vadd.f32 %v1294, %v1317
        %v1319 = vpop.f32.mrf.mxu0
        %v1320 = vadd.f32 %v1296, %v1319
        %1321 = vmatmul.bf16.gmra.mxu0 %v1020
        %v1322 = vpop.f32.mrf.mxu0
        %v1323 = vadd.f32 %v1299, %v1322
        %v1324 = vpop.f32.mrf.mxu0
        %v1325 = vadd.f32 %v1301, %v1324
        %1326 = vmatmul.bf16.gmra.mxu0 %v1025
        %v1327 = vpop.f32.mrf.mxu0
        %v1328 = vadd.f32 %v1304, %v1327
        %v1329 = vpop.f32.mrf.mxu0
        %v1330 = vadd.f32 %v1306, %v1329
        %1331 = vdwg.mxu0
        %1332 = vmatpush.bf16.msra.mxu0 %v1227
        %1333 = vmatpush.bf16.msra.mxu0 %v1226
        %1334 = vmatpush.bf16.msra.mxu0 %v1225
        %1335 = vmatpush.bf16.msra.mxu0 %v1224
        %1336 = vmatpush.bf16.msra.mxu0 %v1223
        %1337 = vmatpush.bf16.msra.mxu0 %v1222
        %1338 = vmatpush.bf16.msra.mxu0 %v1221
        %1339 = vmatpush.bf16.msra.mxu0 %v1220
        %1340 = vmatmul.bf16.gmra.mxu0 %v1016
        %v1341 = vpop.f32.mrf.mxu0
        %v1342 = vadd.f32 %v1318, %v1341
        %v1343 = vpop.f32.mrf.mxu0
        %v1344 = vadd.f32 %v1320, %v1343
        %1345 = vmatmul.bf16.gmra.mxu0 %v1021
        %v1346 = vpop.f32.mrf.mxu0
        %v1347 = vadd.f32 %v1323, %v1346
        %v1348 = vpop.f32.mrf.mxu0
        %v1349 = vadd.f32 %v1325, %v1348
        %1350 = vmatmul.bf16.gmra.mxu0 %v1026
        %v1351 = vpop.f32.mrf.mxu0
        %v1352 = vadd.f32 %v1328, %v1351
        %v1353 = vpop.f32.mrf.mxu0
        %v1354 = vadd.f32 %v1330, %v1353
        %1355 = vdwg.mxu0
        %1356 = vmatpush.bf16.msra.mxu0 %v1235
        %1357 = vmatpush.bf16.msra.mxu0 %v1234
        %1358 = vmatpush.bf16.msra.mxu0 %v1233
        %1359 = vmatpush.bf16.msra.mxu0 %v1232
        %1360 = vmatpush.bf16.msra.mxu0 %v1231
        %1361 = vmatpush.bf16.msra.mxu0 %v1230
        %1362 = vmatpush.bf16.msra.mxu0 %v1229
        %1363 = vmatpush.bf16.msra.mxu0 %v1228
        %1364 = vmatmul.bf16.gmra.mxu0 %v1017
        %v1365 = vpop.f32.mrf.mxu0
        %v1366 = vadd.f32 %v1342, %v1365
        %v1367 = vpop.f32.mrf.mxu0
        %v1368 = vadd.f32 %v1344, %v1367
        %1369 = vmatmul.bf16.gmra.mxu0 %v1022
        %v1370 = vpop.f32.mrf.mxu0
        %v1371 = vadd.f32 %v1347, %v1370
        %v1372 = vpop.f32.mrf.mxu0
        %v1373 = vadd.f32 %v1349, %v1372
        %1374 = vmatmul.bf16.gmra.mxu0 %v1027
        %v1375 = vpop.f32.mrf.mxu0
        %v1376 = vadd.f32 %v1352, %v1375
        %v1377 = vpop.f32.mrf.mxu0
        %v1378 = vadd.f32 %v1354, %v1377
        %1379 = vdwg.mxu0
        %1380 = vmatpush.bf16.msra.mxu0 %v1243
        %1381 = vmatpush.bf16.msra.mxu0 %v1242
        %1382 = vmatpush.bf16.msra.mxu0 %v1241
        %1383 = vmatpush.bf16.msra.mxu0 %v1240
        %1384 = vmatpush.bf16.msra.mxu0 %v1239
        %1385 = vmatpush.bf16.msra.mxu0 %v1238
        %1386 = vmatpush.bf16.msra.mxu0 %v1237
        %1387 = vmatpush.bf16.msra.mxu0 %v1236
        %1388 = vmatmul.bf16.gmra.mxu0 %v1018
        %v1389 = vpop.f32.mrf.mxu0
        %v1390 = vadd.f32 %v1366, %v1389
        %v1391 = vpop.f32.mrf.mxu0
        %v1392 = vadd.f32 %v1368, %v1391
        %1393 = vmatmul.bf16.gmra.mxu0 %v1023
        %v1394 = vpop.f32.mrf.mxu0
        %v1395 = vadd.f32 %v1371, %v1394
        %v1396 = vpop.f32.mrf.mxu0
        %v1397 = vadd.f32 %v1373, %v1396
        %1398 = vmatmul.bf16.gmra.mxu0 %v1028
        %v1399 = vpop.f32.mrf.mxu0
        %v1400 = vadd.f32 %v1376, %v1399
        %v1401 = vpop.f32.mrf.mxu0
        %v1402 = vadd.f32 %v1378, %v1401
        %1403 = vdwg.mxu0
        %v1404 = vmax.f32 %v1390, 0.0
        %v1405 = vmax.f32 %v1392, 0.0
        %v1406 = vmax.f32 %v1395, 0.0
        %v1407 = vmax.f32 %v1397, 0.0
        %v1408 = vmax.f32 %v1400, 0.0
        %v1409 = vmax.f32 %v1402, 0.0
        %v1416 = vrot.slane %v1404, 1
        %v1417 = vrot.slane %v1405, 1
        %v1418 = vsel %vm558, %v1416, %v1417
        %v1419 = vrot.slane %v1406, 1
        %v1420 = vsel %vm558, %v1417, %v1419
        %v1421 = vrot.slane %v1407, 1
        %v1422 = vsel %vm558, %v1419, %v1421
        %v1423 = vrot.slane %v1408, 1
        %v1424 = vsel %vm558, %v1421, %v1423
        %v1425 = vrot.slane %v1409, 1
        %v1426 = vsel %vm558, %v1423, %v1425
        %v1433 = vmax.f32 %v1404, %v1418
        %v1434 = vmax.f32 %v1405, %v1420
        %v1435 = vmax.f32 %v1406, %v1422
        %v1436 = vmax.f32 %v1407, %v1424
        %v1437 = vmax.f32 %v1408, %v1426
        %v1438 = vmax.f32 %v1409, %v1425
        %v1439 = vrot.slane %v1404, 2
        %v1440 = vrot.slane %v1405, 2
        %v1441 = vsel %vm635, %v1439, %v1440
        %v1442 = vrot.slane %v1406, 2
        %v1443 = vsel %vm635, %v1440, %v1442
        %v1444 = vrot.slane %v1407, 2
        %v1445 = vsel %vm635, %v1442, %v1444
        %v1446 = vrot.slane %v1408, 2
        %v1447 = vsel %vm635, %v1444, %v1446
        %v1448 = vrot.slane %v1409, 2
        %v1449 = vsel %vm635, %v1446, %v1448
        %v1456 = vmax.f32 %v1433, %v1441
        %v1457 = vmax.f32 %v1434, %v1443
        %v1458 = vmax.f32 %v1435, %v1445
        %v1459 = vmax.f32 %v1436, %v1447
        %v1460 = vmax.f32 %v1437, %v1449
        %v1461 = vmax.f32 %v1438, %v1448
        %1462 = vst [vmem:[#allocation4] sm:$0xff] %v1456
        %1463 = vst [vmem:[#allocation4 + $0x8] sm:$0xff] %v1457
        %1464 = vst [vmem:[#allocation4 + $0x10] sm:$0xff] %v1458
        %1465 = vst [vmem:[#allocation4 + $0x18] sm:$0xff] %v1459
        %1466 = vst [vmem:[#allocation4 + $0x20] sm:$0xff] %v1460
        %1467 = vst [vmem:[#allocation4 + $0x28] sm:$0x1f] %v1461
        %1468 = vst [vmem:[#allocation4 + $0x2d] sm:$0xf] 0.0
        %v1469 = vld [vmem:[#allocation4] ss:$3 sm:$0xff]
        %s1470 = scalar_lea.vmem [#allocation4], 24
        %v1471 = vld [vmem:[%s1470] ss:$3 sm:$0xff]
        %s1472 = scalar_lea.vmem [#allocation4], 48
        %v1473 = vld [vmem:[%s1472] ss:$3 sm:$0x1]
        %v1474 = vpack.c.bf16 %v1471, %v1469
        %v1475 = vpack.c.bf16 %v1473, %v1473
        %v1476 = vld [vmem:[%s5] sm:$0xf]
        %v1477 = vld [vmem:[%s5 + $0x4] sm:$0xf]
        %v1478 = vld [vmem:[%s5 + $0x8] sm:$0xf]
        %v1479 = vld [vmem:[%s5 + $0xc] sm:$0xf]
        %v1480 = vld [vmem:[%s5 + $0x10] sm:$0xf]
        %v1481 = vld [vmem:[%s5 + $0x14] sm:$0xf]
        %v1482 = vld [vmem:[%s5 + $0x18] sm:$0xf]
        %v1483 = vld [vmem:[%s5 + $0x1c] sm:$0xf]
        %v1484 = vld [vmem:[%s5 + $0x20] sm:$0xf]
        %v1485 = vld [vmem:[%s5 + $0x24] sm:$0xf]
        %v1486 = vld [vmem:[%s5 + $0x28] sm:$0xf]
        %v1487 = vld [vmem:[%s5 + $0x2c] sm:$0xf]
        %v1488 = vld [vmem:[%s5 + $0x30] sm:$0xf]
        %v1489 = vld [vmem:[%s5 + $0x34] sm:$0xf]
        %v1490 = vld [vmem:[%s5 + $0x38] sm:$0xf]
        %v1491 = vld [vmem:[%s5 + $0x3c] sm:$0xf]
        %v1508 = vunpack.c.l.b16 %v1476
        %v1509 = vunpack.c.l.b16 %v1477
        %v1510 = vunpack.c.l.b16 %v1478
        %v1511 = vunpack.c.l.b16 %v1479
        %v1512 = vunpack.c.l.b16 %v1480
        %v1513 = vunpack.c.l.b16 %v1481
        %v1514 = vunpack.c.l.b16 %v1482
        %v1515 = vunpack.c.l.b16 %v1483
        %v1516 = vunpack.c.l.b16 %v1484
        %v1517 = vunpack.c.l.b16 %v1485
        %v1518 = vunpack.c.l.b16 %v1486
        %v1519 = vunpack.c.l.b16 %v1487
        %v1520 = vunpack.c.l.b16 %v1488
        %v1521 = vunpack.c.l.b16 %v1489
        %v1522 = vunpack.c.l.b16 %v1490
        %v1523 = vunpack.c.l.b16 %v1491
        %v1524 = vpack.c.b16 %v1509, %v1508
        %v1525 = vpack.c.b16 %v1511, %v1510
        %v1526 = vpack.c.b16 %v1513, %v1512
        %v1527 = vpack.c.b16 %v1515, %v1514
        %v1528 = vpack.c.b16 %v1517, %v1516
        %v1529 = vpack.c.b16 %v1519, %v1518
        %v1530 = vpack.c.b16 %v1521, %v1520
        %v1531 = vpack.c.b16 %v1523, %v1522
        %1540 = vmatpush.bf16.msra.mxu0 %v1531
        %1541 = vmatpush.bf16.msra.mxu0 %v1530
        %1542 = vmatpush.bf16.msra.mxu0 %v1529
        %1543 = vmatpush.bf16.msra.mxu0 %v1528
        %1544 = vmatpush.bf16.msra.mxu0 %v1527
        %1545 = vmatpush.bf16.msra.mxu0 %v1526
        %1546 = vmatpush.bf16.msra.mxu0 %v1525
        %1547 = vmatpush.bf16.msra.mxu0 %v1524
        %1548 = vmatmul.bf16.gmra.mxu0 %v1474
        %v1549 = vpop.f32.mrf.mxu0
        %v1550 = vadd.f32 0.0, %v1549
        %v1551 = vpop.f32.mrf.mxu0
        %v1552 = vadd.f32 0.0, %v1551
        %1553 = vmatmul.bf16.gmra.mxu0 %v1475
        %v1554 = vpop.f32.mrf.mxu0
        %v1555 = vadd.f32 0.0, %v1554
        %v1556 = vpop.f32.mrf.mxu0
        %1557 = vdwg.mxu0
        %v1558 = vld [vmem:[%s7] sm:$0xff]
        %v1559 = vld [vmem:[%s7 + $0x8] sm:$0xff]
        %v1560 = vld [vmem:[%s7 + $0x10] sm:$0x1]
        %v1561 = vmul.f32 %v1550, %v1558
        %v1562 = vmul.f32 %v1552, %v1559
        %v1563 = vmul.f32 %v1555, %v1560
        %vm1564 = vcmask 277504
        %v1565 = vsel %vm1564, %v1561, 0.0
        %1566 = vadd.xlane.f32.xlu0 %v1565
        %v1567 = vpop.xlane.xlu0 %1566
        %v1568 = vsel %vm1564, %v1562, 0.0
        %1569 = vadd.xlane.f32.xlu0 %v1568
        %v1570 = vpop.xlane.xlu0 %1569
        %vm1571 = vcmask 270336
        %v1572 = vsel %vm1571, %v1563, 0.0
        %1573 = vadd.xlane.f32.xlu0 %v1572
        %v1574 = vpop.xlane.xlu0 %1573
        %s1575 = scalar_lea.vmem %s7, 24
        %v1576 = vld [vmem:[%s1575] sm:$0xff]
        %v1577 = vld [vmem:[%s1575 + $0x8] sm:$0xff]
        %v1578 = vld [vmem:[%s1575 + $0x10] sm:$0x1]
        %v1579 = vmul.f32 %v1550, %v1576
        %v1580 = vmul.f32 %v1552, %v1577
        %v1581 = vmul.f32 %v1555, %v1578
        %v1582 = vsel %vm1564, %v1579, 0.0
        %1583 = vadd.xlane.f32.xlu0 %v1582
        %v1584 = vpop.xlane.xlu0 %1583
        %v1585 = vsel %vm1564, %v1580, 0.0
        %1586 = vadd.xlane.f32.xlu0 %v1585
        %v1587 = vpop.xlane.xlu0 %1586
        %v1588 = vsel %vm1571, %v1581, 0.0
        %1589 = vadd.xlane.f32.xlu0 %v1588
        %v1590 = vpop.xlane.xlu0 %1589
        %vm1591 = vcmask 7168
        %v1592 = vsel %vm1591, %v1567, %v1584
        %v1593 = vsel %vm1591, %v1570, %v1587
        %v1594 = vsel %vm1591, %v1574, %v1590
        %v1595 = vld [vmem:[%s8] sm:$0x1]
        %vm1596 = vcmask 138240
        %v1598 = vsel %vm1596, %v1595, 0
        %vm1600 = vcmask 1040384
        %v1602 = vsel %vm1600, %v1594, 0
        %1604 = vmatpush.msra.mxu0 0.0
        %1605 = vmatpush.msra.mxu0 0.0
        %1606 = vmatpush.msra.mxu0 0.0
        %1607 = vmatpush.msra.mxu0 0.0
        %1608 = vmatpush.msra.mxu0 0.0
        %1609 = vmatpush.msra.mxu0 0.0
        %1610 = vmatpush.msra.mxu0 0.0
        %1611 = vmatpush.msra.mxu0 0.0
        %1612 = vmatpush.msra.mxu0 0.0
        %1613 = vmatpush.msra.mxu0 0.0
        %1614 = vmatpush.msra.mxu0 0.0
        %1615 = vmatpush.msra.mxu0 0.0
        %1616 = vmatpush.msra.mxu0 0.0
        %1617 = vmatpush.msra.mxu0 %v1602
        %1618 = vmatpush.msra.mxu0 %v1593
        %1619 = vmatpush.msra.mxu0 %v1592
        %1620 = vmatmul.f32.gmra.mxu0 %v1598
        %v1621 = vpop.f32.mrf.mxu0
        %v1622 = vadd.f32 0.0, %v1621
        %1623 = vdwg.mxu0
        %vm1624 = vcmask 15360
        %v1625 = vsel %vm1624, %v1622, 0.0
        %v1626 = vld [vmem:[%s6] sm:$0x1]
        %v1627 = vadd.f32 %v1625, %v1626
        %1628 = vst [vmem:[%s324] sm:$0x1] %v1627
        %s1629 = sand.u32 %s225, 1
        %s1630 = scalar_lea.sflag [#allocation6], %s1629
        %s1631 = sand.u32 %s225, 1
        %s1632 = scalar_lea.vmem [#allocation5], %s1631
        // Predicated region
        $region57: #{tpu_custom_call.1} parent=55 // pred_check
          %p1633 = pneg %p235
        $region58: #{tpu_custom_call.1} parent=55 // pred_check_branch
          %1635 = sbr.rel (%p1633) target = $region60
        $region59: #{tpu_custom_call.1} parent=55 // pred_region
          %1637 = vsyncadd %s1630, 0
          %s1638 = scalar_lea.hbm %s9, %s23
          %s1640 = sshll.u32 %s1632, 4
          %s1641 = int_to_ptr.vmem [resolvable:$true] %s1640
          %s1642 = sshll.u32 %s1638, 4
          %s1643 = int_to_ptr.hbm [resolvable:$true] %s1642
          %1645 = dma.vmem_to_hbm [thread:$0]  %s1641, 16, %s1643, %s1630
        $region60: #{tpu_custom_call.1} parent=55 // pred_fallthru
          _
      $region56: #{tpu_custom_call.1} parent=5 // pred_fallthru
        _
      %p1646 = scmp.le.s32.totalorder 2, %s18
      // Predicated region
      $region61: #{tpu_custom_call.1} parent=5 // pred_check
        %p1647 = pneg %p1646
      $region62: #{tpu_custom_call.1} parent=5 // pred_check_branch
        %1649 = sbr.rel (%p1647) target = $region64
      $region63: #{tpu_custom_call.1} parent=5 // pred_region
        %s1650 = ssub.s32 %s18, 2
        // Predicated region
        $region65: #{tpu_custom_call.1} parent=63 // pred_check
          %p1651 = pneg %p241
        $region66: #{tpu_custom_call.1} parent=63 // pred_check_branch
          %1653 = sbr.rel (%p1651) target = $region68
        $region67: #{tpu_custom_call.1} parent=63 // pred_region
          %s1654 = sand.u32 %s226, 1
          %s1655 = scalar_lea.sflag [#allocation6], %s1654
          %s1656 = sand.u32 %s226, 1
          %s1657 = scalar_lea.vmem [#allocation5], %s1656
          %1659 = dma.done %s1655, 16
        $region68: #{tpu_custom_call.1} parent=63 // pred_fallthru
          _
      $region64: #{tpu_custom_call.1} parent=5 // pred_fallthru
        _
    $region6: #{tpu_custom_call.1} parent=1 // loop_footer
      %s22 = sadd.s32 1, %s18
    $region7: #{tpu_custom_call.1} parent=1 // loop_footer_branch
      %17 = sbr.rel target = $region3
    $region8: #{tpu_custom_call.1} parent=1 // loop_exit
      _
    %1660 = vsyncpa [#allocation6], 1
    %s1661 = scalar_lea.sflag [#allocation6], 1
    %1662 = vsyncpa %s1661, 1

</llo_original>
